<compile_context>
chip_gen: v7x
topology: tpu7x:2x2x1
jax: 0.10.0
libtpu: 0.0.40
codegen_flags: <defaults>
</compile_context>

<pallas_src>
import math
import numpy as np
import jax
import jax.numpy as jnp
from jax import lax
from jax.experimental import pallas as pl
from jax.experimental.pallas import tpu as pltpu

PAD = 0
LN_EPS = 1e-5
NEG_INF = -1e18
MATMUL_DTYPE = jnp.bfloat16   # MXU operand dtype; accumulation / softmax / LN stay f32
# TODO(synk): on v7x consider fp8 weight storage (per-tensor scales) to halve the
# per-layer weight VMEM / HBM streaming; bf16 kept here for cross-generation use.


def _layer_norm(v, g, b):
    mu = jnp.mean(v, axis=-1, keepdims=True)
    var = jnp.mean((v - mu) ** 2, axis=-1, keepdims=True)
    return (v - mu) * lax.rsqrt(var + LN_EPS) * g + b


# -----------------------------------------------------------------------------
# Kernel
# -----------------------------------------------------------------------------
def make_encoder_kernel(n_head, dim_per_head, bt, seq_len, ffn_chunk):
    H, dph = n_head, dim_per_head
    rows = bt * seq_len

    def kernel(x0_hbm, mask_ref,
               wqkv_ref, bqkv_ref, wo_ref, bo_ref,
               ln1g_ref, ln1b_ref,
               w1_ref, b1_ref, w2_ref, b2_ref,
               ln2g_ref, ln2b_ref,
               fg_ref, fb_ref,
               out_ref,
               x_scratch, dma_sem):
        b = pl.program_id(0)
        l = pl.program_id(1)
        last_l = pl.num_programs(1) - 1

        # ---- layer 0: pull this batch tile's activations HBM -> VMEM once ----
        @pl.when(l == 0)
        def _():
            start = b * rows
            if rows % 8 == 0:
                start = pl.multiple_of(start, 8)
            cp = pltpu.make_async_copy(x0_hbm.at[pl.ds(start, rows)],
                                       x_scratch, dma_sem)
            cp.start()
            cp.wait()

        x = x_scratch[...]                     # (rows, D) f32, layer-resident
        mask = mask_ref[...]                   # (bt, 1, S) additive key mask

        # -------- self-attention block: LN1 -> multi-head attn -> residual ----
        a2 = _layer_norm(x, ln1g_ref[0], ln1b_ref[0]).astype(MATMUL_DTYPE)

        def head_out(h):
            # Fused per-head QKV projection: N = 3*dph lanes; 1/sqrt(dph) is
            # pre-folded into the Q columns of wqkv / bqkv.
            qkv = (jnp.dot(a2, wqkv_ref[0, h],
                           preferred_element_type=jnp.float32) + bqkv_ref[0, h])
            q = qkv[:, :dph].reshape(bt, seq_len, dph)
            k = qkv[:, dph:2 * dph].reshape(bt, seq_len, dph)
            v = qkv[:, 2 * dph:].reshape(bt, seq_len, dph)

            s = jnp.einsum('bqd,bkd->bqk',
                           q.astype(MATMUL_DTYPE), k.astype(MATMUL_DTYPE),
                           preferred_element_type=jnp.float32) + mask
            m = jnp.max(s, axis=-1, keepdims=True)
            p = jnp.exp(s - m)
            denom = jnp.sum(p, axis=-1, keepdims=True)
            ctx = jnp.einsum('bqk,bkd->bqd',
                             p.astype(MATMUL_DTYPE), v.astype(MATMUL_DTYPE),
                             preferred_element_type=jnp.float32)
            # Normalize the small (bt,S,dph) context, not the (bt,S,S) probs.
            ctx = ctx * pl.reciprocal(denom, approx=True)
            # Per-head output projection accumulated into a lane-dense (rows,D).
            return jnp.dot(ctx.reshape(rows, dph).astype(MATMUL_DTYPE),
                           wo_ref[0, h], preferred_element_type=jnp.float32)

        # Head 0 initializes the accumulator; remaining heads run under a
        # fori_loop so only one head's temporaries are live at a time.
        acc = head_out(0)
        if H > 1:
            acc = lax.fori_loop(1, H, lambda h, a: a + head_out(h), acc)

        x_scratch[...] = x + acc + bo_ref[0]   # residual (dropout == identity)

        # -------- FFN block: LN2 -> W2(relu(W1)) -> residual, row-chunked -----
        ln2g, ln2b = ln2g_ref[0], ln2b_ref[0]
        b1v, b2v = b1_ref[0], b2_ref[0]
        nchunks = rows // ffn_chunk

        @pl.loop(0, nchunks)
        def _(c):
            r0 = c * ffn_chunk
            if ffn_chunk % 8 == 0:
                r0 = pl.multiple_of(r0, 8)
            xc = x_scratch[pl.ds(r0, ffn_chunk), :]
            hmid = _layer_norm(xc, ln2g, ln2b).astype(MATMUL_DTYPE)
            h1 = jnp.dot(hmid, w1_ref[0], preferred_element_type=jnp.float32) + b1v
            h1 = jnp.maximum(h1, 0.0).astype(MATMUL_DTYPE)
            f = jnp.dot(h1, w2_ref[0], preferred_element_type=jnp.float32) + b2v
            x_scratch[pl.ds(r0, ffn_chunk), :] = xc + f

        # ---- final encoder LayerNorm fused into the last layer step ----------
        @pl.when(l == last_l)
        def _():
            out_ref[...] = _layer_norm(x_scratch[...], fg_ref[...], fb_ref[...])

    return kernel


# -----------------------------------------------------------------------------
# Host-side wrapper
# -----------------------------------------------------------------------------
def _pick_batch_tile(B, S, batch_tile):
    if S % 8 != 0:
        return B                               # single full block, no tiling issues
    cands = [c for c in range(1, min(B, batch_tile) + 1) if B % c == 0]
    pref = [c for c in cands if B // c >= 2]   # keep >= 2 tiles so the parallel
    return max(pref) if pref else max(cands)   # batch axis can feed both v7x TCs


def _pick_ffn_chunk(rows, max_chunk=512):
    if rows % 8 != 0:
        return rows
    best = 8
    for c in range(8, min(rows, max_chunk) + 1, 8):
        if rows % c == 0:
            best = c
    return best


def _vmem_limit_bytes():
    cap = None
    try:
        cap = getattr(pltpu.get_tpu_info(), "vmem_capacity_bytes", None)
    except Exception:
        cap = None
    if not cap:
        cap = 64 * 1024 * 1024                 # conservative (v7x-sized) fallback
    return int(cap * 7 // 8)


def run_encoder(x0, add_mask, kp, *, n_layers, n_head, dim_per_head, seq_len,
                batch_tile=2):
    BS, D = x0.shape
    S = seq_len
    B = BS // S
    H, dph = n_head, dim_per_head
    Hff = kp["w1"].shape[-1]

    bt = _pick_batch_tile(B, S, batch_tile)
    nb = B // bt
    rows = bt * S
    ffn_chunk = _pick_ffn_chunk(rows)

    def lspec(shape):   # per-layer stacked params, indexed by the layer grid axis
        n = len(shape)
        return pl.BlockSpec((1,) + shape, lambda b, l, _n=n: (l,) + (0,) * _n)

    in_specs = [
        pl.BlockSpec(memory_space=pl.ANY),                 # x0 stays in HBM
        pl.BlockSpec((bt, 1, S), lambda b, l: (b, 0, 0)),  # additive key mask
        lspec((H, D, 3 * dph)),                            # fused per-head QKV w
        lspec((H, 1, 3 * dph)),                            # fused per-head QKV b
        lspec((H, dph, D)),                                # per-head out proj
        lspec((1, D)),                                     # bo
        lspec((1, D)), lspec((1, D)),                      # ln1 gamma, beta
        lspec((D, Hff)), lspec((1, Hff)),                  # w1, b1
        lspec((Hff, D)), lspec((1, D)),                    # w2, b2
        lspec((1, D)), lspec((1, D)),                      # ln2 gamma, beta
        pl.BlockSpec((1, D), lambda b, l: (0, 0)),         # final LN gamma
        pl.BlockSpec((1, D), lambda b, l: (0, 0)),         # final LN beta
    ]
    out_specs = pl.BlockSpec((rows, D), lambda b, l: (b, 0))

    kernel = make_encoder_kernel(H, dph, bt, S, ffn_chunk)
    return pl.pallas_call(
        kernel,
        out_shape=jax.ShapeDtypeStruct((BS, D), jnp.float32),
        grid=(nb, n_layers),
        in_specs=in_specs,
        out_specs=out_specs,
        scratch_shapes=[pltpu.VMEM((rows, D), jnp.float32),
                        pltpu.SemaphoreType.DMA(())],
        compiler_params=pltpu.CompilerParams(
            dimension_semantics=("parallel", "arbitrary"),
            vmem_limit_bytes=_vmem_limit_bytes()),
    )(x0, add_mask,
      kp["wqkv"], kp["bqkv"], kp["wo"], kp["bo"],
      kp["ln1_g"], kp["ln1_b"],
      kp["w1"], kp["b1"], kp["w2"], kp["b2"],
      kp["ln2_g"], kp["ln2_b"],
      kp["ln_g"], kp["ln_b"])


# -----------------------------------------------------------------------------
# Parameters
# -----------------------------------------------------------------------------
def sinusoid_position_encoding(max_len, d_model):
    pos = np.arange(max_len, dtype=np.float64)[:, None]
    dim = np.arange(d_model, dtype=np.float64)[None, :]
    angle = pos / np.power(10000.0, 2.0 * (dim // 2) / d_model)
    pe = np.zeros((max_len, d_model), dtype=np.float64)
    pe[:, 0::2] = np.sin(angle[:, 0::2])
    pe[:, 1::2] = np.cos(angle[:, 1::2])
    return jnp.asarray(pe, dtype=jnp.float32)


def init_params(key, n_src_vocab, n_layers, n_head, d_model, d_inner):
    """Parameters in the natural (PyTorch-like) layout, all float32."""
    L = n_layers
    ks = jax.random.split(key, 9)

    def w(k, shape):
        return 0.02 * jax.random.normal(k, shape, jnp.float32)

    emb = w(ks[0], (n_src_vocab, d_model)).at[PAD].set(0.0)   # padding_idx row = 0
    return dict(
        emb=emb,
        wq=w(ks[1], (L, d_model, d_model)), bq=jnp.zeros((L, d_model), jnp.float32),
        wk=w(ks[2], (L, d_model, d_model)), bk=jnp.zeros((L, d_model), jnp.float32),
        wv=w(ks[3], (L, d_model, d_model)), bv=jnp.zeros((L, d_model), jnp.float32),
        wo=w(ks[4], (L, d_model, d_model)), bo=jnp.zeros((L, d_model), jnp.float32),
        ln1_g=jnp.ones((L, d_model), jnp.float32),
        ln1_b=jnp.zeros((L, d_model), jnp.float32),
        w1=w(ks[5], (L, d_model, d_inner)), b1=w(ks[6], (L, d_inner)),
        w2=w(ks[7], (L, d_inner, d_model)), b2=w(ks[8], (L, d_model)),
        ln2_g=jnp.ones((L, d_model), jnp.float32),
        ln2_b=jnp.zeros((L, d_model), jnp.float32),
        ln_g=jnp.ones((d_model,), jnp.float32),
        ln_b=jnp.zeros((d_model,), jnp.float32),
    )


def prepare_kernel_params(p, n_head):
    """Kernel layout: fused per-head QKV with 1/sqrt(dph) folded into Q, per-head
    output projection, bf16 matmul weights, f32 everything else. Per-layer tensors
    keep a leading layer axis so BlockSpec pipelining streams layer l+1's weights
    while layer l computes."""
    L, D, _ = p["wq"].shape
    H = n_head
    dph = D // H
    Hff = p["w1"].shape[-1]
    scale = 1.0 / math.sqrt(dph)

    def split_cols(w):            # (L, D, H*dph) -> (L, H, D, dph), head-major
        return w.reshape(L, D, H, dph).transpose(0, 2, 1, 3)

    def split_bias(b):            # (L, H*dph) -> (L, H, 1, dph)
        return b.reshape(L, H, 1, dph)

    wqkv = jnp.concatenate(
        [split_cols(p["wq"]) * scale, split_cols(p["wk"]), split_cols(p["wv"])],
        axis=-1).astype(MATMUL_DTYPE)                         # (L, H, D, 3*dph)
    bqkv = jnp.concatenate(
        [split_bias(p["bq"]) * scale, split_bias(p["bk"]), split_bias(p["bv"])],
        axis=-1).astype(jnp.float32)                          # (L, H, 1, 3*dph)

    return dict(
        wqkv=wqkv, bqkv=bqkv,
        wo=p["wo"].reshape(L, H, dph, D).astype(MATMUL_DTYPE),
        bo=p["bo"].reshape(L, 1, D),
        ln1_g=p["ln1_g"].reshape(L, 1, D), ln1_b=p["ln1_b"].reshape(L, 1, D),
        w1=p["w1"].astype(MATMUL_DTYPE), b1=p["b1"].reshape(L, 1, Hff),
        w2=p["w2"].astype(MATMUL_DTYPE), b2=p["b2"].reshape(L, 1, D),
        ln2_g=p["ln2_g"].reshape(L, 1, D), ln2_b=p["ln2_b"].reshape(L, 1, D),
        ln_g=p["ln_g"].reshape(1, D), ln_b=p["ln_b"].reshape(1, D),
    )


def encoder_forward(src_seq, params, *, n_layers, n_head, d_model, max_len=64,
                    batch_tile=2):
    B, S = src_seq.shape
    dph = d_model // n_head
    scale = float(d_model) ** 0.5

    pe = sinusoid_position_encoding(max_len, d_model)[:S]
    # TODO(synk): the data-dependent embedding row gather stays in XLA; the
    # *sqrt(d_model) scale + positional add are one cheap fused XLA pass so the
    # kernel never holds the raw-embedding tile double-buffered across layers.
    x0 = (params["emb"][src_seq] * scale + pe).astype(jnp.float32)
    x0 = x0.reshape(B * S, d_model)

    enc_mask = (src_seq == PAD)                                   # (B, S) bool
    add_mask = jnp.where(enc_mask, NEG_INF, 0.0).astype(jnp.float32)[:, None, :]

    kp = prepare_kernel_params(params, n_head)
    out = run_encoder(x0, add_mask, kp, n_layers=n_layers, n_head=n_head,
                      dim_per_head=dph, seq_len=S, batch_tile=batch_tile)
    return out.reshape(B, S, d_model), enc_mask


# -----------------------------------------------------------------------------
# Pure-JAX f32 reference (PyTorch Encoder semantics, eval mode)
# -----------------------------------------------------------------------------
def encoder_reference(src_seq, params, *, n_layers, n_head, d_model, max_len=64):
    B, S = src_seq.shape
    H = n_head
    dph = d_model // H
    pe = sinusoid_position_encoding(max_len, d_model)[:S]
    x = params["emb"][src_seq] * (float(d_model) ** 0.5) + pe
    key_pad = (src_seq == PAD)[:, None, None, :]                  # (B,1,1,S)

    def ln(v, g, b):
        mu = jnp.mean(v, axis=-1, keepdims=True)
        var = jnp.mean((v - mu) ** 2, axis=-1, keepdims=True)
        return (v - mu) * lax.rsqrt(var + LN_EPS) * g + b

    for l in range(n_layers):
        a = ln(x, params["ln1_g"][l], params["ln1_b"][l])

        def heads(w, bias):
            return (a @ w[l] + bias[l]).reshape(B, S, H, dph).transpose(0, 2, 1, 3)

        q = heads(params["wq"], params["bq"])
        k = heads(params["wk"], params["bk"])
        v = heads(params["wv"], params["bv"])
        s = jnp.einsum('bhqd,bhkd->bhqk', q, k) / math.sqrt(dph)
        s = jnp.where(key_pad, NEG_INF, s)
        p = jax.nn.softmax(s, axis=-1)
        ctx = jnp.einsum('bhqk,bhkd->bhqd', p, v)
        ctx = ctx.transpose(0, 2, 1, 3).reshape(B, S, d_model)
        x = x + ctx @ params["wo"][l] + params["bo"][l]

        h = ln(x, params["ln2_g"][l], params["ln2_b"][l])
        h = jnp.maximum(h @ params["w1"][l] + params["b1"][l], 0.0)
        x = x + h @ params["w2"][l] + params["b2"][l]
    return ln(x, params["ln_g"], params["ln_b"]), (src_seq == PAD)


if __name__ == "__main__":
    # small config consistent with the module
    n_src_vocab, n_layers, n_head = 50, 2, 4
    d_model, d_inner = 32, 64
    B, S = 2, 8

    key = jax.random.PRNGKey(0)
    pkey, skey = jax.random.split(key)
    params = init_params(pkey, n_src_vocab, n_layers, n_head, d_model, d_inner)

    src_seq = jax.random.randint(skey, (B, S), 1, n_src_vocab, dtype=jnp.int32)
    src_seq = src_seq.at[1, -2:].set(PAD)     # PAD tokens exercise key masking

    out, enc_mask = encoder_forward(src_seq, params, n_layers=n_layers,
                                    n_head=n_head, d_model=d_model)
    out = jax.block_until_ready(out)
    enc_mask = jax.block_until_ready(enc_mask)

    ref_out, ref_mask = encoder_reference(src_seq, params, n_layers=n_layers,
                                          n_head=n_head, d_model=d_model)
    ref_out = jax.block_until_ready(ref_out)

    assert out.shape == (B, S, d_model) and enc_mask.shape == (B, S)
    assert bool(jnp.all(jnp.isfinite(out)))
    assert bool(jnp.array_equal(enc_mask, ref_mask))
    # bf16 matmul operands + approx softmax reciprocal vs f32 reference -> loose tol.
    max_diff = float(jnp.max(jnp.abs(out - ref_out)))
    assert bool(jnp.allclose(out, ref_out, atol=5e-2, rtol=5e-2)), max_diff
    print("KERNEL_OK")
</pallas_src>

<mosaic_0001>
module attributes {stable_mosaic.version = 11 : i64} {
  func.func @kernel(%arg0: i32, %arg1: i32, %arg2: memref<16x32xf32, #tpu.memory_space<any>>, %arg3: memref<1x1x8xf32, #tpu.memory_space<vmem>>, %arg4: memref<1x4x32x24xbf16, #tpu.memory_space<vmem>>, %arg5: memref<1x4x1x24xf32, #tpu.memory_space<vmem>>, %arg6: memref<1x4x8x32xbf16, #tpu.memory_space<vmem>>, %arg7: memref<1x1x32xf32, #tpu.memory_space<vmem>>, %arg8: memref<1x1x32xf32, #tpu.memory_space<vmem>>, %arg9: memref<1x1x32xf32, #tpu.memory_space<vmem>>, %arg10: memref<1x32x64xbf16, #tpu.memory_space<vmem>>, %arg11: memref<1x1x64xf32, #tpu.memory_space<vmem>>, %arg12: memref<1x64x32xbf16, #tpu.memory_space<vmem>>, %arg13: memref<1x1x32xf32, #tpu.memory_space<vmem>>, %arg14: memref<1x1x32xf32, #tpu.memory_space<vmem>>, %arg15: memref<1x1x32xf32, #tpu.memory_space<vmem>>, %arg16: memref<1x32xf32, #tpu.memory_space<vmem>>, %arg17: memref<1x32xf32, #tpu.memory_space<vmem>>, %arg18: memref<8x32xf32, #tpu.memory_space<vmem>>, %arg19: memref<8x32xf32, #tpu.memory_space<vmem>>, %arg20: memref<!tpu.dma_semaphore, #tpu.memory_space<semaphore_mem>>) attributes {dimension_semantics = [#tpu.dimension_semantics<parallel>, #tpu.dimension_semantics<arbitrary>], iteration_bounds = array<i64: 2, 2>, scalar_prefetch = 0 : i64, scratch_operands = 2 : i64, tpu.core_type = #tpu.core_type<tc>, window_params = [{}, {transform_indices = @transform_1, window_bounds = array<i64: 1, 1, 8>}, {transform_indices = @transform_2, window_bounds = array<i64: 1, 4, 32, 24>}, {transform_indices = @transform_3, window_bounds = array<i64: 1, 4, 1, 24>}, {transform_indices = @transform_4, window_bounds = array<i64: 1, 4, 8, 32>}, {transform_indices = @transform_5, window_bounds = array<i64: 1, 1, 32>}, {transform_indices = @transform_6, window_bounds = array<i64: 1, 1, 32>}, {transform_indices = @transform_7, window_bounds = array<i64: 1, 1, 32>}, {transform_indices = @transform_8, window_bounds = array<i64: 1, 32, 64>}, {transform_indices = @transform_9, window_bounds = array<i64: 1, 1, 64>}, {transform_indices = @transform_10, window_bounds = array<i64: 1, 64, 32>}, {transform_indices = @transform_11, window_bounds = array<i64: 1, 1, 32>}, {transform_indices = @transform_12, window_bounds = array<i64: 1, 1, 32>}, {transform_indices = @transform_13, window_bounds = array<i64: 1, 1, 32>}, {pipeline_mode = #tpu.pipeline_mode<synchronous>, transform_indices = @transform_14, window_bounds = array<i64: 1, 32>}, {pipeline_mode = #tpu.pipeline_mode<synchronous>, transform_indices = @transform_15, window_bounds = array<i64: 1, 32>}, {transform_indices = @transform_16, window_bounds = array<i64: 8, 32>}]} {
    %c0_i32 = arith.constant 0 : i32
    %0 = arith.cmpi eq, %arg1, %c0_i32 : i32
    %1 = arith.extui %0 : i1 to i32
    %c0_i32_0 = arith.constant 0 : i32
    %2 = arith.cmpi ne, %1, %c0_i32_0 : i32
    scf.if %2 {
      %c8_i32_74 = arith.constant 8 : i32
      %132 = arith.muli %arg0, %c8_i32_74 : i32
      %133 = tpu.assume_multiple %132, 8 : i32
      %c0_i32_75 = arith.constant 0 : i32
      %134 = tpu.memref_slice %arg2[%133, %c0_i32_75] : memref<16x32xf32, #tpu.memory_space<any>> -> memref<8x32xf32, #tpu.memory_space<any>>
      tpu.enqueue_dma source(%134 : memref<8x32xf32, #tpu.memory_space<any>>) target(%arg19 : memref<8x32xf32, #tpu.memory_space<vmem>>) target_semaphore(%arg20 : memref<!tpu.dma_semaphore, #tpu.memory_space<semaphore_mem>>)
      %c0_i32_76 = arith.constant 0 : i32
      %135 = tpu.memref_slice %arg2[%133, %c0_i32_76] : memref<16x32xf32, #tpu.memory_space<any>> -> memref<8x32xf32, #tpu.memory_space<any>>
      tpu.wait_dma2 semaphore(%arg20 : memref<!tpu.dma_semaphore, #tpu.memory_space<semaphore_mem>>) src(%135 : memref<8x32xf32, #tpu.memory_space<any>>) dst(%arg19 : memref<8x32xf32, #tpu.memory_space<vmem>>)
    } else {
    }
    %c0 = arith.constant 0 : index
    %c0_1 = arith.constant 0 : index
    %3 = vector.load %arg19[%c0, %c0_1] : memref<8x32xf32, #tpu.memory_space<vmem>>, vector<8x32xf32>
    %c0_2 = arith.constant 0 : index
    %c0_3 = arith.constant 0 : index
    %c0_4 = arith.constant 0 : index
    %4 = vector.load %arg3[%c0_2, %c0_3, %c0_4] : memref<1x1x8xf32, #tpu.memory_space<vmem>>, vector<1x1x8xf32>
    %c0_5 = arith.constant 0 : index
    %c0_6 = arith.constant 0 : index
    %c0_7 = arith.constant 0 : index
    %5 = vector.load %arg8[%c0_5, %c0_6, %c0_7] : memref<1x1x32xf32, #tpu.memory_space<vmem>>, vector<1x1x32xf32>
    %6 = vector.shape_cast %5 : vector<1x1x32xf32> to vector<1x32xf32>
    %c0_8 = arith.constant 0 : index
    %c0_9 = arith.constant 0 : index
    %c0_10 = arith.constant 0 : index
    %7 = vector.load %arg9[%c0_8, %c0_9, %c0_10] : memref<1x1x32xf32, #tpu.memory_space<vmem>>, vector<1x1x32xf32>
    %8 = vector.shape_cast %7 : vector<1x1x32xf32> to vector<1x32xf32>
    %cst = arith.constant dense<0.000000e+00> : vector<8xf32>
    %9 = vector.multi_reduction <add>, %3, %cst [1] : vector<8x32xf32> to vector<8xf32>
    %10 = vector.shape_cast %9 : vector<8xf32> to vector<8x1xf32>
    %cst_11 = arith.constant 3.200000e+01 : f32
    %11 = vector.broadcast %cst_11 : f32 to vector<8x1xf32>
    %12 = arith.divf %10, %11 : vector<8x1xf32>
    %13 = vector.broadcast %12 : vector<8x1xf32> to vector<8x32xf32>
    %14 = arith.subf %3, %13 : vector<8x32xf32>
    %15 = arith.mulf %14, %14 : vector<8x32xf32>
    %cst_12 = arith.constant dense<0.000000e+00> : vector<8xf32>
    %16 = vector.multi_reduction <add>, %15, %cst_12 [1] : vector<8x32xf32> to vector<8xf32>
    %17 = vector.shape_cast %16 : vector<8xf32> to vector<8x1xf32>
    %cst_13 = arith.constant 3.200000e+01 : f32
    %18 = vector.broadcast %cst_13 : f32 to vector<8x1xf32>
    %19 = arith.divf %17, %18 : vector<8x1xf32>
    %20 = vector.broadcast %12 : vector<8x1xf32> to vector<8x32xf32>
    %21 = arith.subf %3, %20 : vector<8x32xf32>
    %cst_14 = arith.constant 9.99999974E-6 : f32
    %22 = vector.broadcast %cst_14 : f32 to vector<8x1xf32>
    %23 = arith.addf %19, %22 : vector<8x1xf32>
    %24 = math.rsqrt %23 : vector<8x1xf32>
    %25 = vector.broadcast %24 : vector<8x1xf32> to vector<8x32xf32>
    %26 = arith.mulf %21, %25 : vector<8x32xf32>
    %27 = vector.broadcast %6 : vector<1x32xf32> to vector<8x32xf32>
    %28 = arith.mulf %26, %27 : vector<8x32xf32>
    %29 = vector.broadcast %8 : vector<1x32xf32> to vector<8x32xf32>
    %30 = arith.addf %28, %29 : vector<8x32xf32>
    %31 = arith.truncf %30 : vector<8x32xf32> to vector<8x32xbf16>
    %c0_15 = arith.constant 0 : index
    %c0_16 = arith.constant 0 : index
    %c0_17 = arith.constant 0 : index
    %c0_18 = arith.constant 0 : index
    %32 = vector.load %arg4[%c0_15, %c0_16, %c0_17, %c0_18] : memref<1x4x32x24xbf16, #tpu.memory_space<vmem>>, vector<1x1x32x24xbf16>
    %33 = vector.shape_cast %32 : vector<1x1x32x24xbf16> to vector<32x24xbf16>
    %cst_19 = arith.constant dense<0.000000e+00> : vector<8x24xf32>
    %34 = tpu.matmul %31, %33, %cst_19 {dimension_numbers = #tpu.dot_dimension_numbers<[1], [0], [0], [1], [0, 0, 1, 1], [], []>} : vector<8x32xbf16>, vector<32x24xbf16>, vector<8x24xf32> -> vector<8x24xf32>
    %c0_20 = arith.constant 0 : index
    %c0_21 = arith.constant 0 : index
    %c0_22 = arith.constant 0 : index
    %c0_23 = arith.constant 0 : index
    %35 = vector.load %arg5[%c0_20, %c0_21, %c0_22, %c0_23] : memref<1x4x1x24xf32, #tpu.memory_space<vmem>>, vector<1x1x1x24xf32>
    %36 = vector.shape_cast %35 : vector<1x1x1x24xf32> to vector<1x24xf32>
    %37 = vector.broadcast %36 : vector<1x24xf32> to vector<8x24xf32>
    %38 = arith.addf %34, %37 : vector<8x24xf32>
    %39 = vector.extract_strided_slice %38 {offsets = [0, 0], sizes = [8, 8], strides = [1, 1]} : vector<8x24xf32> to vector<8x8xf32>
    %40 = vector.shape_cast %39 : vector<8x8xf32> to vector<1x8x8xf32>
    %41 = vector.extract_strided_slice %38 {offsets = [0, 8], sizes = [8, 8], strides = [1, 1]} : vector<8x24xf32> to vector<8x8xf32>
    %42 = vector.shape_cast %41 : vector<8x8xf32> to vector<1x8x8xf32>
    %43 = vector.extract_strided_slice %38 {offsets = [0, 16], sizes = [8, 8], strides = [1, 1]} : vector<8x24xf32> to vector<8x8xf32>
    %44 = vector.shape_cast %43 : vector<8x8xf32> to vector<1x8x8xf32>
    %45 = arith.truncf %40 : vector<1x8x8xf32> to vector<1x8x8xbf16>
    %46 = arith.truncf %42 : vector<1x8x8xf32> to vector<1x8x8xbf16>
    "tpu.trace_start"() <{level = 10 : i32, message = "bqd,bkd->bqk"}> : () -> ()
    %cst_24 = arith.constant dense<0.000000e+00> : vector<1x8x8xf32>
    %47 = tpu.matmul %45, %46, %cst_24 {dimension_numbers = #tpu.dot_dimension_numbers<[2], [2], [1], [1], [0, 0, 0, 1, 1, 1], [0], [0]>} : vector<1x8x8xbf16>, vector<1x8x8xbf16>, vector<1x8x8xf32> -> vector<1x8x8xf32>
    "tpu.trace_stop"() : () -> ()
    %48 = vector.broadcast %4 : vector<1x1x8xf32> to vector<1x8x8xf32>
    %49 = arith.addf %47, %48 : vector<1x8x8xf32>
    %cst_25 = arith.constant dense<0xFF800000> : vector<1x8xf32>
    %50 = vector.multi_reduction <maximumf>, %49, %cst_25 [2] : vector<1x8x8xf32> to vector<1x8xf32>
    %51 = vector.shape_cast %50 : vector<1x8xf32> to vector<1x8x1xf32>
    %52 = vector.broadcast %51 : vector<1x8x1xf32> to vector<1x8x8xf32>
    %53 = arith.subf %49, %52 : vector<1x8x8xf32>
    %54 = math.exp %53 : vector<1x8x8xf32>
    %cst_26 = arith.constant dense<0.000000e+00> : vector<1x8xf32>
    %55 = vector.multi_reduction <add>, %54, %cst_26 [2] : vector<1x8x8xf32> to vector<1x8xf32>
    %56 = vector.shape_cast %55 : vector<1x8xf32> to vector<1x8x1xf32>
    %57 = arith.truncf %54 : vector<1x8x8xf32> to vector<1x8x8xbf16>
    %58 = arith.truncf %44 : vector<1x8x8xf32> to vector<1x8x8xbf16>
    "tpu.trace_start"() <{level = 10 : i32, message = "bqk,bkd->bqd"}> : () -> ()
    %cst_27 = arith.constant dense<0.000000e+00> : vector<1x8x8xf32>
    %59 = tpu.matmul %57, %58, %cst_27 {dimension_numbers = #tpu.dot_dimension_numbers<[2], [1], [1], [2], [0, 0, 0, 1, 1, 2], [0], [0]>} : vector<1x8x8xbf16>, vector<1x8x8xbf16>, vector<1x8x8xf32> -> vector<1x8x8xf32>
    "tpu.trace_stop"() : () -> ()
    %60 = tpu.reciprocal %56 {approx = true} : vector<1x8x1xf32> -> vector<1x8x1xf32>
    %61 = vector.broadcast %60 : vector<1x8x1xf32> to vector<1x8x8xf32>
    %62 = arith.mulf %59, %61 : vector<1x8x8xf32>
    %63 = vector.shape_cast %62 : vector<1x8x8xf32> to vector<8x8xf32>
    %64 = arith.truncf %63 : vector<8x8xf32> to vector<8x8xbf16>
    %c0_28 = arith.constant 0 : index
    %c0_29 = arith.constant 0 : index
    %c0_30 = arith.constant 0 : index
    %c0_31 = arith.constant 0 : index
    %65 = vector.load %arg6[%c0_28, %c0_29, %c0_30, %c0_31] : memref<1x4x8x32xbf16, #tpu.memory_space<vmem>>, vector<1x1x8x32xbf16>
    %66 = vector.shape_cast %65 : vector<1x1x8x32xbf16> to vector<8x32xbf16>
    %cst_32 = arith.constant dense<0.000000e+00> : vector<8x32xf32>
    %67 = tpu.matmul %64, %66, %cst_32 {dimension_numbers = #tpu.dot_dimension_numbers<[1], [0], [0], [1], [0, 0, 1, 1], [], []>} : vector<8x8xbf16>, vector<8x32xbf16>, vector<8x32xf32> -> vector<8x32xf32>
    %c1_i32 = arith.constant 1 : i32
    %c3_i32 = arith.constant 3 : i32
    %68 = arith.addi %c1_i32, %c3_i32 : i32
    %c1_i32_33 = arith.constant 1 : i32
    %69 = scf.for %arg21 = %c1_i32 to %68 step %c1_i32_33 iter_args(%arg22 = %67) -> (vector<8x32xf32>)  : i32 {
      %c0_74 = arith.constant 0 : index
      %132 = arith.index_cast %arg21 : i32 to index
      %c0_75 = arith.constant 0 : index
      %c0_76 = arith.constant 0 : index
      %133 = vector.load %arg4[%c0_74, %132, %c0_75, %c0_76] : memref<1x4x32x24xbf16, #tpu.memory_space<vmem>>, vector<1x1x32x24xbf16>
      %134 = vector.shape_cast %133 : vector<1x1x32x24xbf16> to vector<32x24xbf16>
      %cst_77 = arith.constant dense<0.000000e+00> : vector<8x24xf32>
      %135 = tpu.matmul %31, %134, %cst_77 {dimension_numbers = #tpu.dot_dimension_numbers<[1], [0], [0], [1], [0, 0, 1, 1], [], []>} : vector<8x32xbf16>, vector<32x24xbf16>, vector<8x24xf32> -> vector<8x24xf32>
      %c0_78 = arith.constant 0 : index
      %136 = arith.index_cast %arg21 : i32 to index
      %c0_79 = arith.constant 0 : index
      %c0_80 = arith.constant 0 : index
      %137 = vector.load %arg5[%c0_78, %136, %c0_79, %c0_80] : memref<1x4x1x24xf32, #tpu.memory_space<vmem>>, vector<1x1x1x24xf32>
      %138 = vector.shape_cast %137 : vector<1x1x1x24xf32> to vector<1x24xf32>
      %139 = vector.broadcast %138 : vector<1x24xf32> to vector<8x24xf32>
      %140 = arith.addf %135, %139 : vector<8x24xf32>
      %141 = vector.extract_strided_slice %140 {offsets = [0, 0], sizes = [8, 8], strides = [1, 1]} : vector<8x24xf32> to vector<8x8xf32>
      %142 = vector.shape_cast %141 : vector<8x8xf32> to vector<1x8x8xf32>
      %143 = vector.extract_strided_slice %140 {offsets = [0, 8], sizes = [8, 8], strides = [1, 1]} : vector<8x24xf32> to vector<8x8xf32>
      %144 = vector.shape_cast %143 : vector<8x8xf32> to vector<1x8x8xf32>
      %145 = vector.extract_strided_slice %140 {offsets = [0, 16], sizes = [8, 8], strides = [1, 1]} : vector<8x24xf32> to vector<8x8xf32>
      %146 = vector.shape_cast %145 : vector<8x8xf32> to vector<1x8x8xf32>
      %147 = arith.truncf %142 : vector<1x8x8xf32> to vector<1x8x8xbf16>
      %148 = arith.truncf %144 : vector<1x8x8xf32> to vector<1x8x8xbf16>
      "tpu.trace_start"() <{level = 10 : i32, message = "bqd,bkd->bqk"}> : () -> ()
      %cst_81 = arith.constant dense<0.000000e+00> : vector<1x8x8xf32>
      %149 = tpu.matmul %147, %148, %cst_81 {dimension_numbers = #tpu.dot_dimension_numbers<[2], [2], [1], [1], [0, 0, 0, 1, 1, 1], [0], [0]>} : vector<1x8x8xbf16>, vector<1x8x8xbf16>, vector<1x8x8xf32> -> vector<1x8x8xf32>
      "tpu.trace_stop"() : () -> ()
      %150 = vector.broadcast %4 : vector<1x1x8xf32> to vector<1x8x8xf32>
      %151 = arith.addf %149, %150 : vector<1x8x8xf32>
      %cst_82 = arith.constant dense<0xFF800000> : vector<1x8xf32>
      %152 = vector.multi_reduction <maximumf>, %151, %cst_82 [2] : vector<1x8x8xf32> to vector<1x8xf32>
      %153 = vector.shape_cast %152 : vector<1x8xf32> to vector<1x8x1xf32>
      %154 = vector.broadcast %153 : vector<1x8x1xf32> to vector<1x8x8xf32>
      %155 = arith.subf %151, %154 : vector<1x8x8xf32>
      %156 = math.exp %155 : vector<1x8x8xf32>
      %cst_83 = arith.constant dense<0.000000e+00> : vector<1x8xf32>
      %157 = vector.multi_reduction <add>, %156, %cst_83 [2] : vector<1x8x8xf32> to vector<1x8xf32>
      %158 = vector.shape_cast %157 : vector<1x8xf32> to vector<1x8x1xf32>
      %159 = arith.truncf %156 : vector<1x8x8xf32> to vector<1x8x8xbf16>
      %160 = arith.truncf %146 : vector<1x8x8xf32> to vector<1x8x8xbf16>
      "tpu.trace_start"() <{level = 10 : i32, message = "bqk,bkd->bqd"}> : () -> ()
      %cst_84 = arith.constant dense<0.000000e+00> : vector<1x8x8xf32>
      %161 = tpu.matmul %159, %160, %cst_84 {dimension_numbers = #tpu.dot_dimension_numbers<[2], [1], [1], [2], [0, 0, 0, 1, 1, 2], [0], [0]>} : vector<1x8x8xbf16>, vector<1x8x8xbf16>, vector<1x8x8xf32> -> vector<1x8x8xf32>
      "tpu.trace_stop"() : () -> ()
      %162 = tpu.reciprocal %158 {approx = true} : vector<1x8x1xf32> -> vector<1x8x1xf32>
      %163 = vector.broadcast %162 : vector<1x8x1xf32> to vector<1x8x8xf32>
      %164 = arith.mulf %161, %163 : vector<1x8x8xf32>
      %165 = vector.shape_cast %164 : vector<1x8x8xf32> to vector<8x8xf32>
      %166 = arith.truncf %165 : vector<8x8xf32> to vector<8x8xbf16>
      %c0_85 = arith.constant 0 : index
      %167 = arith.index_cast %arg21 : i32 to index
      %c0_86 = arith.constant 0 : index
      %c0_87 = arith.constant 0 : index
      %168 = vector.load %arg6[%c0_85, %167, %c0_86, %c0_87] : memref<1x4x8x32xbf16, #tpu.memory_space<vmem>>, vector<1x1x8x32xbf16>
      %169 = vector.shape_cast %168 : vector<1x1x8x32xbf16> to vector<8x32xbf16>
      %cst_88 = arith.constant dense<0.000000e+00> : vector<8x32xf32>
      %170 = tpu.matmul %166, %169, %cst_88 {dimension_numbers = #tpu.dot_dimension_numbers<[1], [0], [0], [1], [0, 0, 1, 1], [], []>} : vector<8x8xbf16>, vector<8x32xbf16>, vector<8x32xf32> -> vector<8x32xf32>
      %171 = arith.addf %arg22, %170 : vector<8x32xf32>
      scf.yield %171 : vector<8x32xf32>
    }
    %c3_i32_34 = arith.constant 3 : i32
    %70 = arith.addf %3, %69 : vector<8x32xf32>
    %c0_35 = arith.constant 0 : index
    %c0_36 = arith.constant 0 : index
    %c0_37 = arith.constant 0 : index
    %71 = vector.load %arg7[%c0_35, %c0_36, %c0_37] : memref<1x1x32xf32, #tpu.memory_space<vmem>>, vector<1x1x32xf32>
    %72 = vector.shape_cast %71 : vector<1x1x32xf32> to vector<1x32xf32>
    %73 = vector.broadcast %72 : vector<1x32xf32> to vector<8x32xf32>
    %74 = arith.addf %70, %73 : vector<8x32xf32>
    %c0_38 = arith.constant 0 : index
    %c0_39 = arith.constant 0 : index
    %75 = vector.load %arg19[%c0_38, %c0_39] : memref<8x32xf32, #tpu.memory_space<vmem>>, vector<8x32xf32>
    tpu.vector_store %arg19[%c0_38, %c0_39], %74 {strides = array<i32>} : memref<8x32xf32, #tpu.memory_space<vmem>>, vector<8x32xf32>,
    %c0_40 = arith.constant 0 : index
    %c0_41 = arith.constant 0 : index
    %c0_42 = arith.constant 0 : index
    %76 = vector.load %arg14[%c0_40, %c0_41, %c0_42] : memref<1x1x32xf32, #tpu.memory_space<vmem>>, vector<1x1x32xf32>
    %77 = vector.shape_cast %76 : vector<1x1x32xf32> to vector<1x32xf32>
    %c0_43 = arith.constant 0 : index
    %c0_44 = arith.constant 0 : index
    %c0_45 = arith.constant 0 : index
    %78 = vector.load %arg15[%c0_43, %c0_44, %c0_45] : memref<1x1x32xf32, #tpu.memory_space<vmem>>, vector<1x1x32xf32>
    %79 = vector.shape_cast %78 : vector<1x1x32xf32> to vector<1x32xf32>
    %c0_46 = arith.constant 0 : index
    %c0_47 = arith.constant 0 : index
    %c0_48 = arith.constant 0 : index
    %80 = vector.load %arg11[%c0_46, %c0_47, %c0_48] : memref<1x1x64xf32, #tpu.memory_space<vmem>>, vector<1x1x64xf32>
    %81 = vector.shape_cast %80 : vector<1x1x64xf32> to vector<1x64xf32>
    %c0_49 = arith.constant 0 : index
    %c0_50 = arith.constant 0 : index
    %c0_51 = arith.constant 0 : index
    %82 = vector.load %arg13[%c0_49, %c0_50, %c0_51] : memref<1x1x32xf32, #tpu.memory_space<vmem>>, vector<1x1x32xf32>
    %83 = vector.shape_cast %82 : vector<1x1x32xf32> to vector<1x32xf32>
    %c0_i32_52 = arith.constant 0 : i32
    %c1_i32_53 = arith.constant 1 : i32
    %84 = arith.muli %c0_i32_52, %c1_i32_53 : i32
    %c0_i32_54 = arith.constant 0 : i32
    %85 = arith.addi %c0_i32_54, %84 : i32
    %c8_i32 = arith.constant 8 : i32
    %86 = arith.muli %85, %c8_i32 : i32
    %87 = tpu.assume_multiple %86, 8 : i32
    %88 = arith.index_cast %87 : i32 to index
    %c0_55 = arith.constant 0 : index
    %89 = vector.load %arg19[%88, %c0_55] : memref<8x32xf32, #tpu.memory_space<vmem>>, vector<8x32xf32>
    %cst_56 = arith.constant dense<0.000000e+00> : vector<8xf32>
    %90 = vector.multi_reduction <add>, %89, %cst_56 [1] : vector<8x32xf32> to vector<8xf32>
    %91 = vector.shape_cast %90 : vector<8xf32> to vector<8x1xf32>
    %cst_57 = arith.constant 3.200000e+01 : f32
    %92 = vector.broadcast %cst_57 : f32 to vector<8x1xf32>
    %93 = arith.divf %91, %92 : vector<8x1xf32>
    %94 = vector.broadcast %93 : vector<8x1xf32> to vector<8x32xf32>
    %95 = arith.subf %89, %94 : vector<8x32xf32>
    %96 = arith.mulf %95, %95 : vector<8x32xf32>
    %cst_58 = arith.constant dense<0.000000e+00> : vector<8xf32>
    %97 = vector.multi_reduction <add>, %96, %cst_58 [1] : vector<8x32xf32> to vector<8xf32>
    %98 = vector.shape_cast %97 : vector<8xf32> to vector<8x1xf32>
    %cst_59 = arith.constant 3.200000e+01 : f32
    %99 = vector.broadcast %cst_59 : f32 to vector<8x1xf32>
    %100 = arith.divf %98, %99 : vector<8x1xf32>
    %101 = vector.broadcast %93 : vector<8x1xf32> to vector<8x32xf32>
    %102 = arith.subf %89, %101 : vector<8x32xf32>
    %cst_60 = arith.constant 9.99999974E-6 : f32
    %103 = vector.broadcast %cst_60 : f32 to vector<8x1xf32>
    %104 = arith.addf %100, %103 : vector<8x1xf32>
    %105 = math.rsqrt %104 : vector<8x1xf32>
    %106 = vector.broadcast %105 : vector<8x1xf32> to vector<8x32xf32>
    %107 = arith.mulf %102, %106 : vector<8x32xf32>
    %108 = vector.broadcast %77 : vector<1x32xf32> to vector<8x32xf32>
    %109 = arith.mulf %107, %108 : vector<8x32xf32>
    %110 = vector.broadcast %79 : vector<1x32xf32> to vector<8x32xf32>
    %111 = arith.addf %109, %110 : vector<8x32xf32>
    %112 = arith.truncf %111 : vector<8x32xf32> to vector<8x32xbf16>
    %c0_61 = arith.constant 0 : index
    %c0_62 = arith.constant 0 : index
    %c0_63 = arith.constant 0 : index
    %113 = vector.load %arg10[%c0_61, %c0_62, %c0_63] : memref<1x32x64xbf16, #tpu.memory_space<vmem>>, vector<1x32x64xbf16>
    %114 = vector.shape_cast %113 : vector<1x32x64xbf16> to vector<32x64xbf16>
    %cst_64 = arith.constant dense<0.000000e+00> : vector<8x64xf32>
    %115 = tpu.matmul %112, %114, %cst_64 {dimension_numbers = #tpu.dot_dimension_numbers<[1], [0], [0], [1], [0, 0, 1, 1], [], []>} : vector<8x32xbf16>, vector<32x64xbf16>, vector<8x64xf32> -> vector<8x64xf32>
    %116 = vector.broadcast %81 : vector<1x64xf32> to vector<8x64xf32>
    %117 = arith.addf %115, %116 : vector<8x64xf32>
    %cst_65 = arith.constant 0.000000e+00 : f32
    %118 = vector.broadcast %cst_65 : f32 to vector<8x64xf32>
    %119 = arith.maximumf %117, %118 : vector<8x64xf32>
    %120 = arith.truncf %119 : vector<8x64xf32> to vector<8x64xbf16>
    %c0_66 = arith.constant 0 : index
    %c0_67 = arith.constant 0 : index
    %c0_68 = arith.constant 0 : index
    %121 = vector.load %arg12[%c0_66, %c0_67, %c0_68] : memref<1x64x32xbf16, #tpu.memory_space<vmem>>, vector<1x64x32xbf16>
    %122 = vector.shape_cast %121 : vector<1x64x32xbf16> to vector<64x32xbf16>
    %cst_69 = arith.constant dense<0.000000e+00> : vector<8x32xf32>
    %123 = tpu.matmul %120, %122, %cst_69 {dimension_numbers = #tpu.dot_dimension_numbers<[1], [0], [0], [1], [0, 0, 1, 1], [], []>} : vector<8x64xbf16>, vector<64x32xbf16>, vector<8x32xf32> -> vector<8x32xf32>
    %124 = vector.broadcast %83 : vector<1x32xf32> to vector<8x32xf32>
    %125 = arith.addf %123, %124 : vector<8x32xf32>
    %126 = arith.addf %89, %125 : vector<8x32xf32>
    %127 = arith.index_cast %87 : i32 to index
    %c0_70 = arith.constant 0 : index
    %128 = vector.load %arg19[%127, %c0_70] : memref<8x32xf32, #tpu.memory_space<vmem>>, vector<8x32xf32>
    tpu.vector_store %arg19[%127, %c0_70], %126 {strides = array<i32>} : memref<8x32xf32, #tpu.memory_space<vmem>>, vector<8x32xf32>,
    %c1_i32_71 = arith.constant 1 : i32
    %c1_i32_72 = arith.constant 1 : i32
    %129 = arith.cmpi eq, %arg1, %c1_i32_72 : i32
    %130 = arith.extui %129 : i1 to i32
    %c0_i32_73 = arith.constant 0 : i32
    %131 = arith.cmpi ne, %130, %c0_i32_73 : i32
    scf.if %131 {
      %c0_74 = arith.constant 0 : index
      %c0_75 = arith.constant 0 : index
      %132 = vector.load %arg19[%c0_74, %c0_75] : memref<8x32xf32, #tpu.memory_space<vmem>>, vector<8x32xf32>
      %c0_76 = arith.constant 0 : index
      %c0_77 = arith.constant 0 : index
      %133 = vector.load %arg16[%c0_76, %c0_77] : memref<1x32xf32, #tpu.memory_space<vmem>>, vector<1x32xf32>
      %c0_78 = arith.constant 0 : index
      %c0_79 = arith.constant 0 : index
      %134 = vector.load %arg17[%c0_78, %c0_79] : memref<1x32xf32, #tpu.memory_space<vmem>>, vector<1x32xf32>
      %cst_80 = arith.constant dense<0.000000e+00> : vector<8xf32>
      %135 = vector.multi_reduction <add>, %132, %cst_80 [1] : vector<8x32xf32> to vector<8xf32>
      %136 = vector.shape_cast %135 : vector<8xf32> to vector<8x1xf32>
      %cst_81 = arith.constant 3.200000e+01 : f32
      %137 = vector.broadcast %cst_81 : f32 to vector<8x1xf32>
      %138 = arith.divf %136, %137 : vector<8x1xf32>
      %139 = vector.broadcast %138 : vector<8x1xf32> to vector<8x32xf32>
      %140 = arith.subf %132, %139 : vector<8x32xf32>
      %141 = arith.mulf %140, %140 : vector<8x32xf32>
      %cst_82 = arith.constant dense<0.000000e+00> : vector<8xf32>
      %142 = vector.multi_reduction <add>, %141, %cst_82 [1] : vector<8x32xf32> to vector<8xf32>
      %143 = vector.shape_cast %142 : vector<8xf32> to vector<8x1xf32>
      %cst_83 = arith.constant 3.200000e+01 : f32
      %144 = vector.broadcast %cst_83 : f32 to vector<8x1xf32>
      %145 = arith.divf %143, %144 : vector<8x1xf32>
      %146 = vector.broadcast %138 : vector<8x1xf32> to vector<8x32xf32>
      %147 = arith.subf %132, %146 : vector<8x32xf32>
      %cst_84 = arith.constant 9.99999974E-6 : f32
      %148 = vector.broadcast %cst_84 : f32 to vector<8x1xf32>
      %149 = arith.addf %145, %148 : vector<8x1xf32>
      %150 = math.rsqrt %149 : vector<8x1xf32>
      %151 = vector.broadcast %150 : vector<8x1xf32> to vector<8x32xf32>
      %152 = arith.mulf %147, %151 : vector<8x32xf32>
      %153 = vector.broadcast %133 : vector<1x32xf32> to vector<8x32xf32>
      %154 = arith.mulf %152, %153 : vector<8x32xf32>
      %155 = vector.broadcast %134 : vector<1x32xf32> to vector<8x32xf32>
      %156 = arith.addf %154, %155 : vector<8x32xf32>
      %c0_85 = arith.constant 0 : index
      %c0_86 = arith.constant 0 : index
      %157 = vector.load %arg18[%c0_85, %c0_86] : memref<8x32xf32, #tpu.memory_space<vmem>>, vector<8x32xf32>
      tpu.vector_store %arg18[%c0_85, %c0_86], %156 {strides = array<i32>} : memref<8x32xf32, #tpu.memory_space<vmem>>, vector<8x32xf32>,
    } else {
    }
    return
  }
  func.func @transform_1(%arg0: i32, %arg1: i32) -> (i32, i32, i32) {
    %c0_i32 = arith.constant 0 : i32
    %c0_i32_0 = arith.constant 0 : i32
    %c0_i32_1 = arith.constant 0 : i32
    return %arg0, %c0_i32, %c0_i32_0 : i32, i32, i32
  }
  func.func @transform_2(%arg0: i32, %arg1: i32) -> (i32, i32, i32, i32) {
    %c0_i32 = arith.constant 0 : i32
    %c0_i32_0 = arith.constant 0 : i32
    %c0_i32_1 = arith.constant 0 : i32
    %c0_i32_2 = arith.constant 0 : i32
    return %arg1, %c0_i32, %c0_i32_0, %c0_i32_1 : i32, i32, i32, i32
  }
  func.func @transform_3(%arg0: i32, %arg1: i32) -> (i32, i32, i32, i32) {
    %c0_i32 = arith.constant 0 : i32
    %c0_i32_0 = arith.constant 0 : i32
    %c0_i32_1 = arith.constant 0 : i32
    %c0_i32_2 = arith.constant 0 : i32
    return %arg1, %c0_i32, %c0_i32_0, %c0_i32_1 : i32, i32, i32, i32
  }
  func.func @transform_4(%arg0: i32, %arg1: i32) -> (i32, i32, i32, i32) {
    %c0_i32 = arith.constant 0 : i32
    %c0_i32_0 = arith.constant 0 : i32
    %c0_i32_1 = arith.constant 0 : i32
    %c0_i32_2 = arith.constant 0 : i32
    return %arg1, %c0_i32, %c0_i32_0, %c0_i32_1 : i32, i32, i32, i32
  }
  func.func @transform_5(%arg0: i32, %arg1: i32) -> (i32, i32, i32) {
    %c0_i32 = arith.constant 0 : i32
    %c0_i32_0 = arith.constant 0 : i32
    %c0_i32_1 = arith.constant 0 : i32
    return %arg1, %c0_i32, %c0_i32_0 : i32, i32, i32
  }
  func.func @transform_6(%arg0: i32, %arg1: i32) -> (i32, i32, i32) {
    %c0_i32 = arith.constant 0 : i32
    %c0_i32_0 = arith.constant 0 : i32
    %c0_i32_1 = arith.constant 0 : i32
    return %arg1, %c0_i32, %c0_i32_0 : i32, i32, i32
  }
  func.func @transform_7(%arg0: i32, %arg1: i32) -> (i32, i32, i32) {
    %c0_i32 = arith.constant 0 : i32
    %c0_i32_0 = arith.constant 0 : i32
    %c0_i32_1 = arith.constant 0 : i32
    return %arg1, %c0_i32, %c0_i32_0 : i32, i32, i32
  }
  func.func @transform_8(%arg0: i32, %arg1: i32) -> (i32, i32, i32) {
    %c0_i32 = arith.constant 0 : i32
    %c0_i32_0 = arith.constant 0 : i32
    %c0_i32_1 = arith.constant 0 : i32
    return %arg1, %c0_i32, %c0_i32_0 : i32, i32, i32
  }
  func.func @transform_9(%arg0: i32, %arg1: i32) -> (i32, i32, i32) {
    %c0_i32 = arith.constant 0 : i32
    %c0_i32_0 = arith.constant 0 : i32
    %c0_i32_1 = arith.constant 0 : i32
    return %arg1, %c0_i32, %c0_i32_0 : i32, i32, i32
  }
  func.func @transform_10(%arg0: i32, %arg1: i32) -> (i32, i32, i32) {
    %c0_i32 = arith.constant 0 : i32
    %c0_i32_0 = arith.constant 0 : i32
    %c0_i32_1 = arith.constant 0 : i32
    return %arg1, %c0_i32, %c0_i32_0 : i32, i32, i32
  }
  func.func @transform_11(%arg0: i32, %arg1: i32) -> (i32, i32, i32) {
    %c0_i32 = arith.constant 0 : i32
    %c0_i32_0 = arith.constant 0 : i32
    %c0_i32_1 = arith.constant 0 : i32
    return %arg1, %c0_i32, %c0_i32_0 : i32, i32, i32
  }
  func.func @transform_12(%arg0: i32, %arg1: i32) -> (i32, i32, i32) {
    %c0_i32 = arith.constant 0 : i32
    %c0_i32_0 = arith.constant 0 : i32
    %c0_i32_1 = arith.constant 0 : i32
    return %arg1, %c0_i32, %c0_i32_0 : i32, i32, i32
  }
  func.func @transform_13(%arg0: i32, %arg1: i32) -> (i32, i32, i32) {
    %c0_i32 = arith.constant 0 : i32
    %c0_i32_0 = arith.constant 0 : i32
    %c0_i32_1 = arith.constant 0 : i32
    return %arg1, %c0_i32, %c0_i32_0 : i32, i32, i32
  }
  func.func @transform_14(%arg0: i32, %arg1: i32) -> (i32, i32) {
    %c0_i32 = arith.constant 0 : i32
    %c0_i32_0 = arith.constant 0 : i32
    %c0_i32_1 = arith.constant 0 : i32
    return %c0_i32, %c0_i32_0 : i32, i32
  }
  func.func @transform_15(%arg0: i32, %arg1: i32) -> (i32, i32) {
    %c0_i32 = arith.constant 0 : i32
    %c0_i32_0 = arith.constant 0 : i32
    %c0_i32_1 = arith.constant 0 : i32
    return %c0_i32, %c0_i32_0 : i32, i32
  }
  func.func @transform_16(%arg0: i32, %arg1: i32) -> (i32, i32) {
    %c0_i32 = arith.constant 0 : i32
    %c0_i32_0 = arith.constant 0 : i32
    return %arg0, %c0_i32 : i32, i32
  }
}

</mosaic_0001>

<llo_original>
// kernel: tpu_custom_call.1
$region0: #{tpu_custom_call.1}
  #allocation0 [shape = 'u32[]', space=smem, size = 0x4, offset = 0x4, fixed_abs, tag = 'smem constant byte address 0x4 - core index']
  #allocation1 [shape = 'u32[144,128]{1,0:T(1,128)}', space=vmem, size = 0x12000, scoped, tag = 'internal scratch']
  #allocation2 [shape = 'f32[8,32]{1,0:T(8,128)}', space=vmem, size = 0x1000, scoped, tag = 'scratch operand']
  #allocation3 [shape = 's32[1]{0}', space=sflag, size = 0x4, scoped, tag = 'scratch operand']
  #allocation6 [shape = 's32[]', space=sflag, size = 0x4, offset = 0, fixed_abs, tag = 'sflag constant byte address 0x0 - dummy sync flag']
  %s0 = inlined_call_operand.vmem [shape: f32[16,32], index: 0, kind: input, shape index: {}]
  %s1 = inlined_call_operand.vmem [shape: f32[2,1,8], index: 1, kind: input, shape index: {}]
  %s2 = inlined_call_operand.vmem [shape: bf16[2,4,32,24], index: 2, kind: input, shape index: {}]
  %s3 = inlined_call_operand.vmem [shape: f32[2,4,1,24], index: 3, kind: input, shape index: {}]
  %s4 = inlined_call_operand.vmem [shape: bf16[2,4,8,32], index: 4, kind: input, shape index: {}]
  %s5 = inlined_call_operand.vmem [shape: f32[2,1,32], index: 5, kind: input, shape index: {}]
  %s6 = inlined_call_operand.vmem [shape: f32[2,1,32], index: 6, kind: input, shape index: {}]
  %s7 = inlined_call_operand.vmem [shape: f32[2,1,32], index: 7, kind: input, shape index: {}]
  %s8 = inlined_call_operand.vmem [shape: bf16[2,32,64], index: 8, kind: input, shape index: {}]
  %s9 = inlined_call_operand.vmem [shape: f32[2,1,64], index: 9, kind: input, shape index: {}]
  %s10 = inlined_call_operand.vmem [shape: bf16[2,64,32], index: 10, kind: input, shape index: {}]
  %s11 = inlined_call_operand.vmem [shape: f32[2,1,32], index: 11, kind: input, shape index: {}]
  %s12 = inlined_call_operand.vmem [shape: f32[2,1,32], index: 12, kind: input, shape index: {}]
  %s13 = inlined_call_operand.vmem [shape: f32[2,1,32], index: 13, kind: input, shape index: {}]
  %s14 = inlined_call_operand.vmem [shape: f32[1,32], index: 14, kind: input, shape index: {}]
  %s15 = inlined_call_operand.vmem [shape: f32[1,32], index: 15, kind: input, shape index: {}]
  %s16 = inlined_call_operand.hbm [shape: f32[16,32], index: 16, kind: output, shape index: {}]
  %s17 = sld [smem:[#allocation0]]
  $region142: #{tpu_custom_call.1} parent=0
    _
  %s19 = ssub.s32 1, %s17
  %s20 = scalar_select 0, %s19, %s17
  $region1: #{tpu_custom_call.1} parent=0
    #allocation4 [shape = 'u8[8192]{0}', space=vmem, size = 0x2000, scoped, tag = 'output window, operand 0']
    #allocation5 [shape = 's32[2]{0}', space=sflag, size = 0x8, scoped, tag = 'scoped memory for tpu_custom_call.1']
    %21 = vsyncpa [#allocation5], 0
    %s22 = scalar_lea.sflag [#allocation5], 1
    %23 = vsyncpa %s22, 0
    loop: start=0, step=1, limit=6
    $region2: #{tpu_custom_call.1} parent=1 // loop_pre_header
      _
    $region3: #{tpu_custom_call.1} parent=1 // loop_header
      %s25 = sphi 0, %s29
      %p26 = scmp.ge.s32.totalorder %s25, 6
      %s32 = sphi 0, %s44
      %s33 = sphi 0, %s40
      %s34 = sphi 0, %s32
      %s35 = sphi 0, %s33
      %s36 = sphi 0, %s34
      %s37 = sphi 0, %s35
      %s47 = sphi 0, %s49
      %s50 = sphi 0, %s47
      %s51 = sphi 0, %s50
      %s67 = sphi 0, %s51
      %s73 = sphi 0, %s75
      %s76 = sphi 0, %s73
      %s77 = sphi 0, %s76
      %s93 = sphi 0, %s77
      %s99 = sphi 0, %s101
      %s102 = sphi 0, %s99
      %s103 = sphi 0, %s102
      %s119 = sphi 0, %s103
      %s125 = sphi 0, %s127
      %s128 = sphi 0, %s125
      %s129 = sphi 0, %s128
      %s145 = sphi 0, %s129
      %s151 = sphi 0, %s153
      %s154 = sphi 0, %s151
      %s155 = sphi 0, %s154
      %s171 = sphi 0, %s155
      %s177 = sphi 0, %s179
      %s180 = sphi 0, %s177
      %s181 = sphi 0, %s180
      %s197 = sphi 0, %s181
      %s203 = sphi 0, %s205
      %s206 = sphi 0, %s203
      %s207 = sphi 0, %s206
      %s223 = sphi 0, %s207
      %s229 = sphi 0, %s231
      %s232 = sphi 0, %s229
      %s233 = sphi 0, %s232
      %s249 = sphi 0, %s233
      %s255 = sphi 0, %s257
      %s258 = sphi 0, %s255
      %s259 = sphi 0, %s258
      %s275 = sphi 0, %s259
      %s281 = sphi 0, %s283
      %s284 = sphi 0, %s281
      %s285 = sphi 0, %s284
      %s301 = sphi 0, %s285
      %s307 = sphi 0, %s309
      %s310 = sphi 0, %s307
      %s311 = sphi 0, %s310
      %s327 = sphi 0, %s311
      %s333 = sphi 0, %s335
      %s336 = sphi 0, %s333
      %s337 = sphi 0, %s336
      %s353 = sphi 0, %s337
      %s359 = sphi 0, %s361
      %s362 = sphi 0, %s359
      %s363 = sphi 0, %s362
      %s379 = sphi 0, %s363
      %s383 = sphi 0, %s383
      %s385 = sphi 0, %s383
      %s386 = sphi 0, %s385
      %s400 = sphi 0, %s386
      %s404 = sphi 0, %s404
      %s406 = sphi 0, %s404
      %s407 = sphi 0, %s406
      %s421 = sphi 0, %s407
      %s427 = sphi 0, %s429
      %s430 = sphi 0, %s427
      %s431 = sphi 0, %s430
      %s447 = sphi 0, %s431
    $region4: #{tpu_custom_call.1} parent=1 // loop_header_branch
      %28 = sbr.rel (%p26) target = $region8
    $region5: #{tpu_custom_call.1} parent=1 // loop_body
      %s30 = ssub.s32 %s25, 1
      %s31 = ssub.s32 %s25, 2
      %s38 = sadd.s32 1, %s33
      %p39 = scmp.ge.s32.totalorder %s38, 2
      %s40 = scalar_select %p39, 0, %s38
      %s41 = sadd.s32 1, %s32
      %s42 = scalar_select %p39, %s41, %s32
      %p43 = scmp.ge.s32.totalorder %s42, 2
      %s44 = scalar_select %p43, 0, %s42
      %s45 = ssub.s32 %s32, %s44
      %p46 = scmp.eq.s32.totalorder %s45, 0
      %s48 = sadd.s32 %s47, 1
      %s49 = scalar_select %p46, %s47, %s48
      %p52 = pneg %p46
      %p53 = scmp.eq.s32.totalorder %s25, 3
      %p54 = por %p52, %p53
      %p55 = scmp.ne.s32.totalorder %s47, %s50
      %p56 = scmp.eq.s32.totalorder %s25, 0
      %p57 = por %p55, %p56
      %p58 = scmp.ne.s32.totalorder %s47, %s50
      %p59 = scmp.eq.s32.totalorder %s30, 3
      %p60 = por %p58, %p59
      %p61 = scmp.ne.s32.totalorder %s50, %s51
      %p62 = scmp.eq.s32.totalorder %s30, 0
      %p63 = por %p61, %p62
      %p64 = scmp.ne.s32.totalorder %s50, %s51
      %p65 = scmp.eq.s32.totalorder %s31, 3
      %p66 = por %p64, %p65
      %p68 = scmp.ne.s32.totalorder %s51, %s67
      %p69 = scmp.eq.s32.totalorder %s31, 0
      %p70 = por %p68, %p69
      %s71 = ssub.s32 %s33, %s40
      %p72 = scmp.eq.s32.totalorder %s71, 0
      %s74 = sadd.s32 %s73, 1
      %s75 = scalar_select %p72, %s73, %s74
      %p78 = pneg %p72
      %p79 = scmp.eq.s32.totalorder %s25, 3
      %p80 = por %p78, %p79
      %p81 = scmp.ne.s32.totalorder %s73, %s76
      %p82 = scmp.eq.s32.totalorder %s25, 0
      %p83 = por %p81, %p82
      %p84 = scmp.ne.s32.totalorder %s73, %s76
      %p85 = scmp.eq.s32.totalorder %s30, 3
      %p86 = por %p84, %p85
      %p87 = scmp.ne.s32.totalorder %s76, %s77
      %p88 = scmp.eq.s32.totalorder %s30, 0
      %p89 = por %p87, %p88
      %p90 = scmp.ne.s32.totalorder %s76, %s77
      %p91 = scmp.eq.s32.totalorder %s31, 3
      %p92 = por %p90, %p91
      %p94 = scmp.ne.s32.totalorder %s77, %s93
      %p95 = scmp.eq.s32.totalorder %s31, 0
      %p96 = por %p94, %p95
      %s97 = ssub.s32 %s33, %s40
      %p98 = scmp.eq.s32.totalorder %s97, 0
      %s100 = sadd.s32 %s99, 1
      %s101 = scalar_select %p98, %s99, %s100
      %p104 = pneg %p98
      %p105 = scmp.eq.s32.totalorder %s25, 3
      %p106 = por %p104, %p105
      %p107 = scmp.ne.s32.totalorder %s99, %s102
      %p108 = scmp.eq.s32.totalorder %s25, 0
      %p109 = por %p107, %p108
      %p110 = scmp.ne.s32.totalorder %s99, %s102
      %p111 = scmp.eq.s32.totalorder %s30, 3
      %p112 = por %p110, %p111
      %p113 = scmp.ne.s32.totalorder %s102, %s103
      %p114 = scmp.eq.s32.totalorder %s30, 0
      %p115 = por %p113, %p114
      %p116 = scmp.ne.s32.totalorder %s102, %s103
      %p117 = scmp.eq.s32.totalorder %s31, 3
      %p118 = por %p116, %p117
      %p120 = scmp.ne.s32.totalorder %s103, %s119
      %p121 = scmp.eq.s32.totalorder %s31, 0
      %p122 = por %p120, %p121
      %s123 = ssub.s32 %s33, %s40
      %p124 = scmp.eq.s32.totalorder %s123, 0
      %s126 = sadd.s32 %s125, 1
      %s127 = scalar_select %p124, %s125, %s126
      %p130 = pneg %p124
      %p131 = scmp.eq.s32.totalorder %s25, 3
      %p132 = por %p130, %p131
      %p133 = scmp.ne.s32.totalorder %s125, %s128
      %p134 = scmp.eq.s32.totalorder %s25, 0
      %p135 = por %p133, %p134
      %p136 = scmp.ne.s32.totalorder %s125, %s128
      %p137 = scmp.eq.s32.totalorder %s30, 3
      %p138 = por %p136, %p137
      %p139 = scmp.ne.s32.totalorder %s128, %s129
      %p140 = scmp.eq.s32.totalorder %s30, 0
      %p141 = por %p139, %p140
      %p142 = scmp.ne.s32.totalorder %s128, %s129
      %p143 = scmp.eq.s32.totalorder %s31, 3
      %p144 = por %p142, %p143
      %p146 = scmp.ne.s32.totalorder %s129, %s145
      %p147 = scmp.eq.s32.totalorder %s31, 0
      %p148 = por %p146, %p147
      %s149 = ssub.s32 %s33, %s40
      %p150 = scmp.eq.s32.totalorder %s149, 0
      %s152 = sadd.s32 %s151, 1
      %s153 = scalar_select %p150, %s151, %s152
      %p156 = pneg %p150
      %p157 = scmp.eq.s32.totalorder %s25, 3
      %p158 = por %p156, %p157
      %p159 = scmp.ne.s32.totalorder %s151, %s154
      %p160 = scmp.eq.s32.totalorder %s25, 0
      %p161 = por %p159, %p160
      %p162 = scmp.ne.s32.totalorder %s151, %s154
      %p163 = scmp.eq.s32.totalorder %s30, 3
      %p164 = por %p162, %p163
      %p165 = scmp.ne.s32.totalorder %s154, %s155
      %p166 = scmp.eq.s32.totalorder %s30, 0
      %p167 = por %p165, %p166
      %p168 = scmp.ne.s32.totalorder %s154, %s155
      %p169 = scmp.eq.s32.totalorder %s31, 3
      %p170 = por %p168, %p169
      %p172 = scmp.ne.s32.totalorder %s155, %s171
      %p173 = scmp.eq.s32.totalorder %s31, 0
      %p174 = por %p172, %p173
      %s175 = ssub.s32 %s33, %s40
      %p176 = scmp.eq.s32.totalorder %s175, 0
      %s178 = sadd.s32 %s177, 1
      %s179 = scalar_select %p176, %s177, %s178
      %p182 = pneg %p176
      %p183 = scmp.eq.s32.totalorder %s25, 3
      %p184 = por %p182, %p183
      %p185 = scmp.ne.s32.totalorder %s177, %s180
      %p186 = scmp.eq.s32.totalorder %s25, 0
      %p187 = por %p185, %p186
      %p188 = scmp.ne.s32.totalorder %s177, %s180
      %p189 = scmp.eq.s32.totalorder %s30, 3
      %p190 = por %p188, %p189
      %p191 = scmp.ne.s32.totalorder %s180, %s181
      %p192 = scmp.eq.s32.totalorder %s30, 0
      %p193 = por %p191, %p192
      %p194 = scmp.ne.s32.totalorder %s180, %s181
      %p195 = scmp.eq.s32.totalorder %s31, 3
      %p196 = por %p194, %p195
      %p198 = scmp.ne.s32.totalorder %s181, %s197
      %p199 = scmp.eq.s32.totalorder %s31, 0
      %p200 = por %p198, %p199
      %s201 = ssub.s32 %s33, %s40
      %p202 = scmp.eq.s32.totalorder %s201, 0
      %s204 = sadd.s32 %s203, 1
      %s205 = scalar_select %p202, %s203, %s204
      %p208 = pneg %p202
      %p209 = scmp.eq.s32.totalorder %s25, 3
      %p210 = por %p208, %p209
      %p211 = scmp.ne.s32.totalorder %s203, %s206
      %p212 = scmp.eq.s32.totalorder %s25, 0
      %p213 = por %p211, %p212
      %p214 = scmp.ne.s32.totalorder %s203, %s206
      %p215 = scmp.eq.s32.totalorder %s30, 3
      %p216 = por %p214, %p215
      %p217 = scmp.ne.s32.totalorder %s206, %s207
      %p218 = scmp.eq.s32.totalorder %s30, 0
      %p219 = por %p217, %p218
      %p220 = scmp.ne.s32.totalorder %s206, %s207
      %p221 = scmp.eq.s32.totalorder %s31, 3
      %p222 = por %p220, %p221
      %p224 = scmp.ne.s32.totalorder %s207, %s223
      %p225 = scmp.eq.s32.totalorder %s31, 0
      %p226 = por %p224, %p225
      %s227 = ssub.s32 %s33, %s40
      %p228 = scmp.eq.s32.totalorder %s227, 0
      %s230 = sadd.s32 %s229, 1
      %s231 = scalar_select %p228, %s229, %s230
      %p234 = pneg %p228
      %p235 = scmp.eq.s32.totalorder %s25, 3
      %p236 = por %p234, %p235
      %p237 = scmp.ne.s32.totalorder %s229, %s232
      %p238 = scmp.eq.s32.totalorder %s25, 0
      %p239 = por %p237, %p238
      %p240 = scmp.ne.s32.totalorder %s229, %s232
      %p241 = scmp.eq.s32.totalorder %s30, 3
      %p242 = por %p240, %p241
      %p243 = scmp.ne.s32.totalorder %s232, %s233
      %p244 = scmp.eq.s32.totalorder %s30, 0
      %p245 = por %p243, %p244
      %p246 = scmp.ne.s32.totalorder %s232, %s233
      %p247 = scmp.eq.s32.totalorder %s31, 3
      %p248 = por %p246, %p247
      %p250 = scmp.ne.s32.totalorder %s233, %s249
      %p251 = scmp.eq.s32.totalorder %s31, 0
      %p252 = por %p250, %p251
      %s253 = ssub.s32 %s33, %s40
      %p254 = scmp.eq.s32.totalorder %s253, 0
      %s256 = sadd.s32 %s255, 1
      %s257 = scalar_select %p254, %s255, %s256
      %p260 = pneg %p254
      %p261 = scmp.eq.s32.totalorder %s25, 3
      %p262 = por %p260, %p261
      %p263 = scmp.ne.s32.totalorder %s255, %s258
      %p264 = scmp.eq.s32.totalorder %s25, 0
      %p265 = por %p263, %p264
      %p266 = scmp.ne.s32.totalorder %s255, %s258
      %p267 = scmp.eq.s32.totalorder %s30, 3
      %p268 = por %p266, %p267
      %p269 = scmp.ne.s32.totalorder %s258, %s259
      %p270 = scmp.eq.s32.totalorder %s30, 0
      %p271 = por %p269, %p270
      %p272 = scmp.ne.s32.totalorder %s258, %s259
      %p273 = scmp.eq.s32.totalorder %s31, 3
      %p274 = por %p272, %p273
      %p276 = scmp.ne.s32.totalorder %s259, %s275
      %p277 = scmp.eq.s32.totalorder %s31, 0
      %p278 = por %p276, %p277
      %s279 = ssub.s32 %s33, %s40
      %p280 = scmp.eq.s32.totalorder %s279, 0
      %s282 = sadd.s32 %s281, 1
      %s283 = scalar_select %p280, %s281, %s282
      %p286 = pneg %p280
      %p287 = scmp.eq.s32.totalorder %s25, 3
      %p288 = por %p286, %p287
      %p289 = scmp.ne.s32.totalorder %s281, %s284
      %p290 = scmp.eq.s32.totalorder %s25, 0
      %p291 = por %p289, %p290
      %p292 = scmp.ne.s32.totalorder %s281, %s284
      %p293 = scmp.eq.s32.totalorder %s30, 3
      %p294 = por %p292, %p293
      %p295 = scmp.ne.s32.totalorder %s284, %s285
      %p296 = scmp.eq.s32.totalorder %s30, 0
      %p297 = por %p295, %p296
      %p298 = scmp.ne.s32.totalorder %s284, %s285
      %p299 = scmp.eq.s32.totalorder %s31, 3
      %p300 = por %p298, %p299
      %p302 = scmp.ne.s32.totalorder %s285, %s301
      %p303 = scmp.eq.s32.totalorder %s31, 0
      %p304 = por %p302, %p303
      %s305 = ssub.s32 %s33, %s40
      %p306 = scmp.eq.s32.totalorder %s305, 0
      %s308 = sadd.s32 %s307, 1
      %s309 = scalar_select %p306, %s307, %s308
      %p312 = pneg %p306
      %p313 = scmp.eq.s32.totalorder %s25, 3
      %p314 = por %p312, %p313
      %p315 = scmp.ne.s32.totalorder %s307, %s310
      %p316 = scmp.eq.s32.totalorder %s25, 0
      %p317 = por %p315, %p316
      %p318 = scmp.ne.s32.totalorder %s307, %s310
      %p319 = scmp.eq.s32.totalorder %s30, 3
      %p320 = por %p318, %p319
      %p321 = scmp.ne.s32.totalorder %s310, %s311
      %p322 = scmp.eq.s32.totalorder %s30, 0
      %p323 = por %p321, %p322
      %p324 = scmp.ne.s32.totalorder %s310, %s311
      %p325 = scmp.eq.s32.totalorder %s31, 3
      %p326 = por %p324, %p325
      %p328 = scmp.ne.s32.totalorder %s311, %s327
      %p329 = scmp.eq.s32.totalorder %s31, 0
      %p330 = por %p328, %p329
      %s331 = ssub.s32 %s33, %s40
      %p332 = scmp.eq.s32.totalorder %s331, 0
      %s334 = sadd.s32 %s333, 1
      %s335 = scalar_select %p332, %s333, %s334
      %p338 = pneg %p332
      %p339 = scmp.eq.s32.totalorder %s25, 3
      %p340 = por %p338, %p339
      %p341 = scmp.ne.s32.totalorder %s333, %s336
      %p342 = scmp.eq.s32.totalorder %s25, 0
      %p343 = por %p341, %p342
      %p344 = scmp.ne.s32.totalorder %s333, %s336
      %p345 = scmp.eq.s32.totalorder %s30, 3
      %p346 = por %p344, %p345
      %p347 = scmp.ne.s32.totalorder %s336, %s337
      %p348 = scmp.eq.s32.totalorder %s30, 0
      %p349 = por %p347, %p348
      %p350 = scmp.ne.s32.totalorder %s336, %s337
      %p351 = scmp.eq.s32.totalorder %s31, 3
      %p352 = por %p350, %p351
      %p354 = scmp.ne.s32.totalorder %s337, %s353
      %p355 = scmp.eq.s32.totalorder %s31, 0
      %p356 = por %p354, %p355
      %s357 = ssub.s32 %s33, %s40
      %p358 = scmp.eq.s32.totalorder %s357, 0
      %s360 = sadd.s32 %s359, 1
      %s361 = scalar_select %p358, %s359, %s360
      %p364 = pneg %p358
      %p365 = scmp.eq.s32.totalorder %s25, 3
      %p366 = por %p364, %p365
      %p367 = scmp.ne.s32.totalorder %s359, %s362
      %p368 = scmp.eq.s32.totalorder %s25, 0
      %p369 = por %p367, %p368
      %p370 = scmp.ne.s32.totalorder %s359, %s362
      %p371 = scmp.eq.s32.totalorder %s30, 3
      %p372 = por %p370, %p371
      %p373 = scmp.ne.s32.totalorder %s362, %s363
      %p374 = scmp.eq.s32.totalorder %s30, 0
      %p375 = por %p373, %p374
      %p376 = scmp.ne.s32.totalorder %s362, %s363
      %p377 = scmp.eq.s32.totalorder %s31, 3
      %p378 = por %p376, %p377
      %p380 = scmp.ne.s32.totalorder %s363, %s379
      %p381 = scmp.eq.s32.totalorder %s31, 0
      %p382 = por %p380, %p381
      %s384 = sadd.s32 %s383, 1
      %p387 = scmp.eq.s32.totalorder %s25, 3
      %p388 = scmp.ne.s32.totalorder %s383, %s385
      %p389 = scmp.eq.s32.totalorder %s25, 0
      %p390 = por %p388, %p389
      %p391 = scmp.ne.s32.totalorder %s383, %s385
      %p392 = scmp.eq.s32.totalorder %s30, 3
      %p393 = por %p391, %p392
      %p394 = scmp.ne.s32.totalorder %s385, %s386
      %p395 = scmp.eq.s32.totalorder %s30, 0
      %p396 = por %p394, %p395
      %p397 = scmp.ne.s32.totalorder %s385, %s386
      %p398 = scmp.eq.s32.totalorder %s31, 3
      %p399 = por %p397, %p398
      %p401 = scmp.ne.s32.totalorder %s386, %s400
      %p402 = scmp.eq.s32.totalorder %s31, 0
      %p403 = por %p401, %p402
      %s405 = sadd.s32 %s404, 1
      %p408 = scmp.eq.s32.totalorder %s25, 3
      %p409 = scmp.ne.s32.totalorder %s404, %s406
      %p410 = scmp.eq.s32.totalorder %s25, 0
      %p411 = por %p409, %p410
      %p412 = scmp.ne.s32.totalorder %s404, %s406
      %p413 = scmp.eq.s32.totalorder %s30, 3
      %p414 = por %p412, %p413
      %p415 = scmp.ne.s32.totalorder %s406, %s407
      %p416 = scmp.eq.s32.totalorder %s30, 0
      %p417 = por %p415, %p416
      %p418 = scmp.ne.s32.totalorder %s406, %s407
      %p419 = scmp.eq.s32.totalorder %s31, 3
      %p420 = por %p418, %p419
      %p422 = scmp.ne.s32.totalorder %s407, %s421
      %p423 = scmp.eq.s32.totalorder %s31, 0
      %p424 = por %p422, %p423
      %s425 = ssub.s32 %s32, %s44
      %p426 = scmp.eq.s32.totalorder %s425, 0
      %s428 = sadd.s32 %s427, 1
      %s429 = scalar_select %p426, %s427, %s428
      %p432 = pneg %p426
      %p433 = scmp.eq.s32.totalorder %s25, 3
      %p434 = por %p432, %p433
      %p435 = scmp.ne.s32.totalorder %s427, %s430
      %p436 = scmp.eq.s32.totalorder %s25, 0
      %p437 = por %p435, %p436
      %p438 = scmp.ne.s32.totalorder %s427, %s430
      %p439 = scmp.eq.s32.totalorder %s30, 3
      %p440 = por %p438, %p439
      %p441 = scmp.ne.s32.totalorder %s430, %s431
      %p442 = scmp.eq.s32.totalorder %s30, 0
      %p443 = por %p441, %p442
      %p444 = scmp.ne.s32.totalorder %s430, %s431
      %p445 = scmp.eq.s32.totalorder %s31, 3
      %p446 = por %p444, %p445
      %p448 = scmp.ne.s32.totalorder %s431, %s447
      %p449 = scmp.eq.s32.totalorder %s31, 0
      %p450 = por %p448, %p449
      %p451 = scmp.le.s32.totalorder 1, %s25
      %p452 = scmp.lt.s32.totalorder %s25, 5
      %p453 = pnand %p451, %p452
      %p454 = pneg %p453
      // Predicated region
      $region9: #{tpu_custom_call.1} parent=5 // pred_check
        _
      $region10: #{tpu_custom_call.1} parent=5 // pred_check_branch
        %456 = sbr.rel (%p453) target = $region12
      $region11: #{tpu_custom_call.1} parent=5 // pred_region
        %s457 = ssub.s32 %s25, 1
        // Predicated region
        $region13: #{tpu_custom_call.1} parent=11 // pred_check
          %p458 = pneg %p396
        $region14: #{tpu_custom_call.1} parent=11 // pred_check_branch
          %460 = sbr.rel (%p458) target = $region16
        $region15: #{tpu_custom_call.1} parent=11 // pred_region
          _
        $region16: #{tpu_custom_call.1} parent=11 // pred_fallthru
          _
        // Predicated region
        $region17: #{tpu_custom_call.1} parent=11 // pred_check
          %p461 = pneg %p417
        $region18: #{tpu_custom_call.1} parent=11 // pred_check_branch
          %463 = sbr.rel (%p461) target = $region20
        $region19: #{tpu_custom_call.1} parent=11 // pred_region
          _
        $region20: #{tpu_custom_call.1} parent=11 // pred_fallthru
          _
      $region12: #{tpu_custom_call.1} parent=5 // pred_fallthru
        _
      %p464 = scmp.lt.s32.totalorder %s25, 4
      // Predicated region
      $region21: #{tpu_custom_call.1} parent=5 // pred_check
        %p465 = pneg %p464
      $region22: #{tpu_custom_call.1} parent=5 // pred_check_branch
        %467 = sbr.rel (%p465) target = $region24
      $region23: #{tpu_custom_call.1} parent=5 // pred_region
        // Predicated region
        $region25: #{tpu_custom_call.1} parent=23 // pred_check
          %p468 = pneg %p57
        $region26: #{tpu_custom_call.1} parent=23 // pred_check_branch
          %470 = sbr.rel (%p468) target = $region28
        $region27: #{tpu_custom_call.1} parent=23 // pred_region
          %p471 = scmp.lt.s32.totalorder %s32, 1
          %s472 = scalar_select %p471, %s32, 1
          %s473 = scalar_lea.vmem %s1, %s472
        $region28: #{tpu_custom_call.1} parent=23 // pred_fallthru
          _
        // Predicated region
        $region29: #{tpu_custom_call.1} parent=23 // pred_check
          %p474 = pneg %p83
        $region30: #{tpu_custom_call.1} parent=23 // pred_check_branch
          %476 = sbr.rel (%p474) target = $region32
        $region31: #{tpu_custom_call.1} parent=23 // pred_region
          %p477 = scmp.lt.s32.totalorder %s33, 1
          %s478 = scalar_select %p477, %s33, 1
          %s479 = smul.addr %s478, 16
          %s480 = smul.addr %s479, 4
          %s481 = scalar_lea.vmem %s2, %s480
        $region32: #{tpu_custom_call.1} parent=23 // pred_fallthru
          _
        // Predicated region
        $region33: #{tpu_custom_call.1} parent=23 // pred_check
          %p482 = pneg %p109
        $region34: #{tpu_custom_call.1} parent=23 // pred_check_branch
          %484 = sbr.rel (%p482) target = $region36
        $region35: #{tpu_custom_call.1} parent=23 // pred_region
          %p485 = scmp.lt.s32.totalorder %s33, 1
          %s486 = scalar_select %p485, %s33, 1
          %s487 = smul.addr %s486, 4
          %s488 = scalar_lea.vmem %s3, %s487
        $region36: #{tpu_custom_call.1} parent=23 // pred_fallthru
          _
        // Predicated region
        $region37: #{tpu_custom_call.1} parent=23 // pred_check
          %p489 = pneg %p135
        $region38: #{tpu_custom_call.1} parent=23 // pred_check_branch
          %491 = sbr.rel (%p489) target = $region40
        $region39: #{tpu_custom_call.1} parent=23 // pred_region
          %p492 = scmp.lt.s32.totalorder %s33, 1
          %s493 = scalar_select %p492, %s33, 1
          %s494 = smul.addr %s493, 4
          %s495 = smul.addr %s494, 4
          %s496 = scalar_lea.vmem %s4, %s495
        $region40: #{tpu_custom_call.1} parent=23 // pred_fallthru
          _
        // Predicated region
        $region41: #{tpu_custom_call.1} parent=23 // pred_check
          %p497 = pneg %p161
        $region42: #{tpu_custom_call.1} parent=23 // pred_check_branch
          %499 = sbr.rel (%p497) target = $region44
        $region43: #{tpu_custom_call.1} parent=23 // pred_region
          %p500 = scmp.lt.s32.totalorder %s33, 1
          %s501 = scalar_select %p500, %s33, 1
          %s502 = scalar_lea.vmem %s5, %s501
        $region44: #{tpu_custom_call.1} parent=23 // pred_fallthru
          _
        // Predicated region
        $region45: #{tpu_custom_call.1} parent=23 // pred_check
          %p503 = pneg %p187
        $region46: #{tpu_custom_call.1} parent=23 // pred_check_branch
          %505 = sbr.rel (%p503) target = $region48
        $region47: #{tpu_custom_call.1} parent=23 // pred_region
          %p506 = scmp.lt.s32.totalorder %s33, 1
          %s507 = scalar_select %p506, %s33, 1
          %s508 = scalar_lea.vmem %s6, %s507
        $region48: #{tpu_custom_call.1} parent=23 // pred_fallthru
          _
        // Predicated region
        $region49: #{tpu_custom_call.1} parent=23 // pred_check
          %p509 = pneg %p213
        $region50: #{tpu_custom_call.1} parent=23 // pred_check_branch
          %511 = sbr.rel (%p509) target = $region52
        $region51: #{tpu_custom_call.1} parent=23 // pred_region
          %p512 = scmp.lt.s32.totalorder %s33, 1
          %s513 = scalar_select %p512, %s33, 1
          %s514 = scalar_lea.vmem %s7, %s513
        $region52: #{tpu_custom_call.1} parent=23 // pred_fallthru
          _
        // Predicated region
        $region53: #{tpu_custom_call.1} parent=23 // pred_check
          %p515 = pneg %p239
        $region54: #{tpu_custom_call.1} parent=23 // pred_check_branch
          %517 = sbr.rel (%p515) target = $region56
        $region55: #{tpu_custom_call.1} parent=23 // pred_region
          %p518 = scmp.lt.s32.totalorder %s33, 1
          %s519 = scalar_select %p518, %s33, 1
          %s520 = smul.addr %s519, 4
          %s521 = smul.addr %s520, 4
          %s522 = scalar_lea.vmem %s8, %s521
        $region56: #{tpu_custom_call.1} parent=23 // pred_fallthru
          _
        // Predicated region
        $region57: #{tpu_custom_call.1} parent=23 // pred_check
          %p523 = pneg %p265
        $region58: #{tpu_custom_call.1} parent=23 // pred_check_branch
          %525 = sbr.rel (%p523) target = $region60
        $region59: #{tpu_custom_call.1} parent=23 // pred_region
          %p526 = scmp.lt.s32.totalorder %s33, 1
          %s527 = scalar_select %p526, %s33, 1
          %s528 = scalar_lea.vmem %s9, %s527
        $region60: #{tpu_custom_call.1} parent=23 // pred_fallthru
          _
        // Predicated region
        $region61: #{tpu_custom_call.1} parent=23 // pred_check
          %p529 = pneg %p291
        $region62: #{tpu_custom_call.1} parent=23 // pred_check_branch
          %531 = sbr.rel (%p529) target = $region64
        $region63: #{tpu_custom_call.1} parent=23 // pred_region
          %p532 = scmp.lt.s32.totalorder %s33, 1
          %s533 = scalar_select %p532, %s33, 1
          %s534 = smul.addr %s533, 8
          %s535 = smul.addr %s534, 4
          %s536 = scalar_lea.vmem %s10, %s535
        $region64: #{tpu_custom_call.1} parent=23 // pred_fallthru
          _
        // Predicated region
        $region65: #{tpu_custom_call.1} parent=23 // pred_check
          %p537 = pneg %p317
        $region66: #{tpu_custom_call.1} parent=23 // pred_check_branch
          %539 = sbr.rel (%p537) target = $region68
        $region67: #{tpu_custom_call.1} parent=23 // pred_region
          %p540 = scmp.lt.s32.totalorder %s33, 1
          %s541 = scalar_select %p540, %s33, 1
          %s542 = scalar_lea.vmem %s11, %s541
        $region68: #{tpu_custom_call.1} parent=23 // pred_fallthru
          _
        // Predicated region
        $region69: #{tpu_custom_call.1} parent=23 // pred_check
          %p543 = pneg %p343
        $region70: #{tpu_custom_call.1} parent=23 // pred_check_branch
          %545 = sbr.rel (%p543) target = $region72
        $region71: #{tpu_custom_call.1} parent=23 // pred_region
          %p546 = scmp.lt.s32.totalorder %s33, 1
          %s547 = scalar_select %p546, %s33, 1
          %s548 = scalar_lea.vmem %s12, %s547
        $region72: #{tpu_custom_call.1} parent=23 // pred_fallthru
          _
        // Predicated region
        $region73: #{tpu_custom_call.1} parent=23 // pred_check
          %p549 = pneg %p369
        $region74: #{tpu_custom_call.1} parent=23 // pred_check_branch
          %551 = sbr.rel (%p549) target = $region76
        $region75: #{tpu_custom_call.1} parent=23 // pred_region
          %p552 = scmp.lt.s32.totalorder %s33, 1
          %s553 = scalar_select %p552, %s33, 1
          %s554 = scalar_lea.vmem %s13, %s553
        $region76: #{tpu_custom_call.1} parent=23 // pred_fallthru
          _
      $region24: #{tpu_custom_call.1} parent=5 // pred_fallthru
        _
      %p555 = scmp.le.s32.totalorder 1, %s25
      %p556 = scmp.lt.s32.totalorder %s25, 5
      %p557 = pnand %p555, %p556
      %p558 = pneg %p557
      // Predicated region
      $region77: #{tpu_custom_call.1} parent=5 // pred_check
        _
      $region78: #{tpu_custom_call.1} parent=5 // pred_check_branch
        %560 = sbr.rel (%p557) target = $region80
      $region79: #{tpu_custom_call.1} parent=5 // pred_region
        %s561 = ssub.s32 %s25, 1
        %p562 = scmp.lt.s32.totalorder %s34, 1
        %s563 = scalar_select %p562, %s34, 1
        %s564 = scalar_lea.vmem %s1, %s563
        %p565 = pneg %p63
        %p566 = pneg %p60
        %p567 = scmp.lt.s32.totalorder %s35, 1
        %s568 = scalar_select %p567, %s35, 1
        %s569 = smul.addr %s568, 16
        %s570 = smul.addr %s569, 4
        %s571 = scalar_lea.vmem %s2, %s570
        %p572 = pneg %p89
        %p573 = pneg %p86
        %p574 = scmp.lt.s32.totalorder %s35, 1
        %s575 = scalar_select %p574, %s35, 1
        %s576 = smul.addr %s575, 4
        %s577 = scalar_lea.vmem %s3, %s576
        %p578 = pneg %p115
        %p579 = pneg %p112
        %p580 = scmp.lt.s32.totalorder %s35, 1
        %s581 = scalar_select %p580, %s35, 1
        %s582 = smul.addr %s581, 4
        %s583 = smul.addr %s582, 4
        %s584 = scalar_lea.vmem %s4, %s583
        %p585 = pneg %p141
        %p586 = pneg %p138
        %p587 = scmp.lt.s32.totalorder %s35, 1
        %s588 = scalar_select %p587, %s35, 1
        %s589 = scalar_lea.vmem %s5, %s588
        %p590 = pneg %p167
        %p591 = pneg %p164
        %p592 = scmp.lt.s32.totalorder %s35, 1
        %s593 = scalar_select %p592, %s35, 1
        %s594 = scalar_lea.vmem %s6, %s593
        %p595 = pneg %p193
        %p596 = pneg %p190
        %p597 = scmp.lt.s32.totalorder %s35, 1
        %s598 = scalar_select %p597, %s35, 1
        %s599 = scalar_lea.vmem %s7, %s598
        %p600 = pneg %p219
        %p601 = pneg %p216
        %p602 = scmp.lt.s32.totalorder %s35, 1
        %s603 = scalar_select %p602, %s35, 1
        %s604 = smul.addr %s603, 4
        %s605 = smul.addr %s604, 4
        %s606 = scalar_lea.vmem %s8, %s605
        %p607 = pneg %p245
        %p608 = pneg %p242
        %p609 = scmp.lt.s32.totalorder %s35, 1
        %s610 = scalar_select %p609, %s35, 1
        %s611 = scalar_lea.vmem %s9, %s610
        %p612 = pneg %p271
        %p613 = pneg %p268
        %p614 = scmp.lt.s32.totalorder %s35, 1
        %s615 = scalar_select %p614, %s35, 1
        %s616 = smul.addr %s615, 8
        %s617 = smul.addr %s616, 4
        %s618 = scalar_lea.vmem %s10, %s617
        %p619 = pneg %p297
        %p620 = pneg %p294
        %p621 = scmp.lt.s32.totalorder %s35, 1
        %s622 = scalar_select %p621, %s35, 1
        %s623 = scalar_lea.vmem %s11, %s622
        %p624 = pneg %p323
        %p625 = pneg %p320
        %p626 = scmp.lt.s32.totalorder %s35, 1
        %s627 = scalar_select %p626, %s35, 1
        %s628 = scalar_lea.vmem %s12, %s627
        %p629 = pneg %p349
        %p630 = pneg %p346
        %p631 = scmp.lt.s32.totalorder %s35, 1
        %s632 = scalar_select %p631, %s35, 1
        %s633 = scalar_lea.vmem %s13, %s632
        %p634 = pneg %p375
        %p635 = pneg %p372
        %p636 = pneg %p396
        %p637 = pneg %p393
        %p638 = pneg %p417
        %p639 = pneg %p414
        %p640 = pneg %p443
        %p641 = pneg %p440
        %s642 = sand.u32 %s430, 1
        %s643 = scalar_lea.sflag [#allocation5], %s642
        %s644 = sand.u32 %s430, 1
        %s645 = smul.addr %s644, 8
        %s646 = scalar_lea.vmem [#allocation4], %s645
        %p647 = scmp.lt.s32.totalorder %s34, 1
        %s648 = scalar_select %p647, %s34, 1
        %s649 = scalar_lea.vmem %s1, %s648
        %p650 = scmp.lt.s32.totalorder %s35, 1
        %s651 = scalar_select %p650, %s35, 1
        %s652 = smul.addr %s651, 16
        %s653 = smul.addr %s652, 4
        %s654 = scalar_lea.vmem %s2, %s653
        %p655 = scmp.lt.s32.totalorder %s35, 1
        %s656 = scalar_select %p655, %s35, 1
        %s657 = smul.addr %s656, 4
        %s658 = scalar_lea.vmem %s3, %s657
        %p659 = scmp.lt.s32.totalorder %s35, 1
        %s660 = scalar_select %p659, %s35, 1
        %s661 = smul.addr %s660, 4
        %s662 = smul.addr %s661, 4
        %s663 = scalar_lea.vmem %s4, %s662
        %p664 = scmp.lt.s32.totalorder %s35, 1
        %s665 = scalar_select %p664, %s35, 1
        %s666 = scalar_lea.vmem %s5, %s665
        %p667 = scmp.lt.s32.totalorder %s35, 1
        %s668 = scalar_select %p667, %s35, 1
        %s669 = scalar_lea.vmem %s6, %s668
        %p670 = scmp.lt.s32.totalorder %s35, 1
        %s671 = scalar_select %p670, %s35, 1
        %s672 = scalar_lea.vmem %s7, %s671
        %p673 = scmp.lt.s32.totalorder %s35, 1
        %s674 = scalar_select %p673, %s35, 1
        %s675 = smul.addr %s674, 4
        %s676 = smul.addr %s675, 4
        %s677 = scalar_lea.vmem %s8, %s676
        %p678 = scmp.lt.s32.totalorder %s35, 1
        %s679 = scalar_select %p678, %s35, 1
        %s680 = scalar_lea.vmem %s9, %s679
        %p681 = scmp.lt.s32.totalorder %s35, 1
        %s682 = scalar_select %p681, %s35, 1
        %s683 = smul.addr %s682, 8
        %s684 = smul.addr %s683, 4
        %s685 = scalar_lea.vmem %s10, %s684
        %p686 = scmp.lt.s32.totalorder %s35, 1
        %s687 = scalar_select %p686, %s35, 1
        %s688 = scalar_lea.vmem %s11, %s687
        %p689 = scmp.lt.s32.totalorder %s35, 1
        %s690 = scalar_select %p689, %s35, 1
        %s691 = scalar_lea.vmem %s12, %s690
        %p692 = scmp.lt.s32.totalorder %s35, 1
        %s693 = scalar_select %p692, %s35, 1
        %s694 = scalar_lea.vmem %s13, %s693
        %p696 = scmp.eq.s32.totalorder %s35, 0
        // Predicated region
        $region81: #{tpu_custom_call.1} parent=79 // pred_check
          %p697 = pneg %p696
        $region82: #{tpu_custom_call.1} parent=79 // pred_check_branch
          %699 = sbr.rel (%p697) target = $region84
        $region83: #{tpu_custom_call.1} parent=79 // pred_region
          %s700 = smul.u32 %s34, 8
          %s701 = scalar_lea.vmem %s0, %s700
          %p703 = scmp.lt.u32.totalorder 8, 8
          %p704 = pneg %p703
          // Predicated region
          $region85: #{tpu_custom_call.1} parent=83 // pred_check
            _
          $region86: #{tpu_custom_call.1} parent=83 // pred_check_branch
            %706 = sbr.rel (%p703) target = $region88
          $region87: #{tpu_custom_call.1} parent=83 // pred_region
            %s721 = sand.u32 8, 7
            %p722 = scmp.eq.s32.totalorder %s721, 0
            // Predicated region
            $region100: #{tpu_custom_call.1} parent=87 // pred_check
              %p723 = pneg %p722
            $region101: #{tpu_custom_call.1} parent=87 // pred_check_branch
              %725 = sbr.rel (%p723) target = $region103
            $region102: #{tpu_custom_call.1} parent=87 // pred_region
              loop: start=0, step=1, limit=1
              $region104: #{tpu_custom_call.1} parent=102 // loop_pre_header
                _
              $region105: #{tpu_custom_call.1} parent=102 // loop_header
                %s727 = sphi 0, %s731
                %p728 = scmp.ge.s32.totalorder %s727, 1
                %s732 = sphi %s701, %s701
                %s733 = sphi [#allocation2], [#allocation2]
              $region106: #{tpu_custom_call.1} parent=102 // loop_header_branch
                %730 = sbr.rel (%p728) target = $region110
              $region107: #{tpu_custom_call.1} parent=102 // loop_body
                %v734 = vld [vmem:[%s732] sm:$0xff]
                %735 = vst [vmem:[%s733] sm:$0xff] %v734
              $region108: #{tpu_custom_call.1} parent=102 // loop_footer
                %s731 = sadd.s32 1, %s727
              $region109: #{tpu_custom_call.1} parent=102 // loop_footer_branch
                %726 = sbr.rel target = $region105
              $region110: #{tpu_custom_call.1} parent=102 // loop_exit
                _
            $region103: #{tpu_custom_call.1} parent=87 // pred_fallthru
              _
            %p736 = pneg %p722
            // Predicated region
            $region111: #{tpu_custom_call.1} parent=87 // pred_check
              _
            $region112: #{tpu_custom_call.1} parent=87 // pred_check_branch
              %738 = sbr.rel (%p722) target = $region114
            $region113: #{tpu_custom_call.1} parent=87 // pred_region
              %s739 = sand.u32 8, 7
            $region114: #{tpu_custom_call.1} parent=87 // pred_fallthru
              _
          $region88: #{tpu_custom_call.1} parent=83 // pred_fallthru
            _
          // Predicated region
          $region89: #{tpu_custom_call.1} parent=83 // pred_check
            %p707 = pneg %p703
          $region90: #{tpu_custom_call.1} parent=83 // pred_check_branch
            %709 = sbr.rel (%p707) target = $region92
          $region91: #{tpu_custom_call.1} parent=83 // pred_region
            %s710 = sshllo.u32 0, 8
            loop: start=0, step=1, limit=1
            $region93: #{tpu_custom_call.1} parent=91 // loop_pre_header
              _
            $region94: #{tpu_custom_call.1} parent=91 // loop_header
              %s712 = sphi 0, %s716
              %p713 = scmp.ge.s32.totalorder %s712, 1
              %s717 = sphi %s701, %s701
              %s718 = sphi [#allocation2], [#allocation2]
            $region95: #{tpu_custom_call.1} parent=91 // loop_header_branch
              %715 = sbr.rel (%p713) target = $region99
            $region96: #{tpu_custom_call.1} parent=91 // loop_body
              %v719 = vld [vmem:[%s717] sm:%s710]
              %720 = vst [vmem:[%s718] sm:%s710] %v719
            $region97: #{tpu_custom_call.1} parent=91 // loop_footer
              %s716 = sadd.s32 1, %s712
            $region98: #{tpu_custom_call.1} parent=91 // loop_footer_branch
              %711 = sbr.rel target = $region94
            $region99: #{tpu_custom_call.1} parent=91 // loop_exit
              _
          $region92: #{tpu_custom_call.1} parent=83 // pred_fallthru
            _
          // Predicated region
          $region115: #{tpu_custom_call.1} parent=83 // pred_check
            _
          $region116: #{tpu_custom_call.1} parent=83 // pred_check_branch
            %742 = sbr.rel (0) target = $region118
          $region117: #{tpu_custom_call.1} parent=83 // pred_region
            %743 = vsyncadd [#allocation3], 128
          $region118: #{tpu_custom_call.1} parent=83 // pred_fallthru
            _
          %s744 = smul.u32 8, 1
          %s745 = sshll.u32 %s744, 4
          %746 = dma.done [#allocation3], %s745
        $region84: #{tpu_custom_call.1} parent=79 // pred_fallthru
          _
        %v747 = vld [vmem:[#allocation2] sm:$0xff]
        %v748 = vld [vmem:[%s649] sm:$0x1]
        %v749 = vld [vmem:[%s669] sm:$0x1]
        %v750 = vld [vmem:[%s672] sm:$0x1]
        %vm751 = vcmask 261120
        %v752 = vsel %vm751, %v747, 0.0
        %753 = vadd.xlane.f32.xlu0 %v752
        %v754 = vpop.xlane.xlu0 %753
        %v755 = vrcp.pop 32.0
        %v756 = vmul.f32 %v754, %v755
        %v757 = vsub.f32 %v747, %v756
        %v758 = vmul.f32 %v757, %v757
        %v759 = vsel %vm751, %v758, 0.0
        %760 = vadd.xlane.f32.xlu0 %v759
        %v761 = vpop.xlane.xlu0 %760
        %v762 = vmul.f32 %v761, %v755
        %v763 = vadd.f32 %v762, 1e-05
        %v764 = vrsqrt.pop %v763
        %v765 = vmul.f32 %v757, %v764
        %v767 = vlaneseq
        %v768 = vshrl.u32 %v767, 7
        %v769 = vsub.s32 0, %v768
        %v770 = vrot.slane %v749, %v769
        %v772 = vmul.f32 %v765, %v770
        %v774 = vlaneseq
        %v775 = vshrl.u32 %v774, 7
        %v776 = vsub.s32 0, %v775
        %v777 = vrot.slane %v750, %v776
        %v779 = vadd.f32 %v772, %v777
        %v780 = vpack.c.bf16 %v779, %v779
        %v781 = vld [vmem:[%s654] sm:$0xf]
        %v782 = vld [vmem:[%s654 + $0x4] sm:$0xf]
        %v783 = vld [vmem:[%s654 + $0x8] sm:$0xf]
        %v784 = vld [vmem:[%s654 + $0xc] sm:$0xf]
        %v785 = vld [vmem:[%s658] sm:$0x1]
        %v787 = vlaneseq
        %v788 = vshrl.u32 %v787, 7
        %v789 = vsub.s32 0, %v788
        %v790 = vrot.slane %v785, %v789
        %v796 = vunpack.c.l.b16 %v781
        %v797 = vunpack.c.l.b16 %v782
        %v798 = vunpack.c.l.b16 %v783
        %v799 = vunpack.c.l.b16 %v784
        %v800 = vpack.c.b16 %v797, %v796
        %v801 = vpack.c.b16 %v799, %v798
        %v805 = vsel %vm751, %v780, 0
        %807 = vmatprep.subr.bf16.mxu0 0
        %808 = vmatpush1.bf16.msra.mxu0 %v800
        %809 = vmatprep.subr.bf16.mxu0 0
        %810 = vmatpush1.bf16.msra.mxu0 %v801
        %811 = vmatprep.subr.bf16.mxu0 0
        %812 = vmatpush1.bf16.msra.mxu0 0
        %813 = vmatprep.subr.bf16.mxu0 0
        %814 = vmatpush1.bf16.msra.mxu0 0
        %815 = vmatprep.subr.bf16.mxu0 0
        %816 = vmatpush1.bf16.msra.mxu0 0
        %817 = vmatprep.subr.bf16.mxu0 0
        %818 = vmatpush1.bf16.msra.mxu0 0
        %819 = vmatprep.subr.bf16.mxu0 0
        %820 = vmatpush1.bf16.msra.mxu0 0
        %821 = vmatprep.subr.bf16.mxu0 0
        %822 = vmatpush1.bf16.msra.mxu0 0
        %823 = vmatprep.subr.bf16.mxu0 0
        %824 = vmatpush1.bf16.msra.mxu0 0
        %825 = vmatprep.subr.bf16.mxu0 0
        %826 = vmatpush1.bf16.msra.mxu0 0
        %827 = vmatprep.subr.bf16.mxu0 0
        %828 = vmatpush1.bf16.msra.mxu0 0
        %829 = vmatprep.subr.bf16.mxu0 0
        %830 = vmatpush1.bf16.msra.mxu0 0
        %831 = vmatprep.subr.bf16.mxu0 0
        %832 = vmatpush1.bf16.msra.mxu0 0
        %833 = vmatprep.subr.bf16.mxu0 0
        %834 = vmatpush1.bf16.msra.mxu0 0
        %835 = vmatprep.subr.bf16.mxu0 0
        %836 = vmatpush1.bf16.msra.mxu0 0
        %837 = vmatprep.subr.bf16.mxu0 0
        %838 = vmatpush1.bf16.msra.mxu0 0
        %839 = vmatprep.mubr.bf16.mxu0 0
        %840 = vmatmul.mubr.bf16.gmra.mrb[0].mxu0 %v805
        %v841 = vpop.f32.mrb[0].mxu0
        %v842 = vadd.f32 %v790, %v841
        %v843 = vpop.f32.mrb[0].mxu0
        %v844 = vpop.f32.mrb[0].mxu0
        %v845 = vpop.f32.mrb[0].mxu0
        %846 = vdwg.mxu0
        %v847 = vpack.c.bf16 %v842, %v842
        %v849 = vlaneseq
        %v850 = vshrl.u32 %v849, 7
        %v851 = vsub.s32 0, %v850
        %v852 = vrot.slane %v748, %v851
        %855 = vrot.lane.b32.xlu0 %v847, 120
        %v856 = vpop.permute.xlu0 %855
        %vm857 = vcmask 64512
        %v859 = vsel %vm857, %v847, 0
        %v862 = vsel %vm857, %v856, 0
        %864 = vmatprep.subr.bf16.mxu0 0
        %865 = vmatpush1.bf16.xpose.msra.mxu0 %v862
        %866 = vmatprep.subr.bf16.mxu0 0
        %867 = vmatpush1.bf16.xpose.msra.mxu0 0
        %868 = vmatprep.subr.bf16.mxu0 0
        %869 = vmatpush1.bf16.xpose.msra.mxu0 0
        %870 = vmatprep.subr.bf16.mxu0 0
        %871 = vmatpush1.bf16.xpose.msra.mxu0 0
        %872 = vmatprep.subr.bf16.mxu0 0
        %873 = vmatpush1.bf16.xpose.msra.mxu0 0
        %874 = vmatprep.subr.bf16.mxu0 0
        %875 = vmatpush1.bf16.xpose.msra.mxu0 0
        %876 = vmatprep.subr.bf16.mxu0 0
        %877 = vmatpush1.bf16.xpose.msra.mxu0 0
        %878 = vmatprep.subr.bf16.mxu0 0
        %879 = vmatpush1.bf16.xpose.msra.mxu0 0
        %880 = vmatprep.subr.bf16.mxu0 0
        %881 = vmatpush1.bf16.xpose.msra.mxu0 0
        %882 = vmatprep.subr.bf16.mxu0 0
        %883 = vmatpush1.bf16.xpose.msra.mxu0 0
        %884 = vmatprep.subr.bf16.mxu0 0
        %885 = vmatpush1.bf16.xpose.msra.mxu0 0
        %886 = vmatprep.subr.bf16.mxu0 0
        %887 = vmatpush1.bf16.xpose.msra.mxu0 0
        %888 = vmatprep.subr.bf16.mxu0 0
        %889 = vmatpush1.bf16.xpose.msra.mxu0 0
        %890 = vmatprep.subr.bf16.mxu0 0
        %891 = vmatpush1.bf16.xpose.msra.mxu0 0
        %892 = vmatprep.subr.bf16.mxu0 0
        %893 = vmatpush1.bf16.xpose.msra.mxu0 0
        %894 = vmatprep.subr.bf16.mxu0 0
        %895 = vmatpush1.bf16.xpose.msra.mxu0 0
        %896 = vmatprep.mubr.bf16.mxu0 0
        %897 = vmatmul.mubr.bf16.gmra.mrb[0].mxu0 %v859
        %v898 = vpop.f32.mrb[0].mxu0
        %v899 = vadd.f32 %v852, %v898
        %v900 = vpop.f32.mrb[0].mxu0
        %v901 = vpop.f32.mrb[0].mxu0
        %v902 = vpop.f32.mrb[0].mxu0
        %903 = vdwg.mxu0
        %v904 = vsel %vm857, %v899, -inf
        %905 = vmax.xlane.f32.xlu0 %v904
        %v906 = vpop.xlane.xlu0 %905
        %v907 = vsub.f32 %v899, %v906
        %v908 = vmul.f32 %v907, 1.442695
        %v909 = vpow.pop %v908
        %v910 = vsel %vm857, %v909, 0.0
        %911 = vadd.xlane.f32.xlu0 %v910
        %v912 = vpop.xlane.xlu0 %911
        %v913 = vpack.c.bf16 %v909, %v909
        %914 = vrot.lane.b32.xlu0 %v847, 112
        %v915 = vpop.permute.xlu0 %914
        %v917 = vsel %vm857, %v913, 0
        %vm919 = vcmask 1043456
        %v921 = vsel %vm919, %v915, 0
        %923 = vmatprep.subr.bf16.mxu0 0
        %924 = vmatpush1.bf16.msra.mxu0 %v921
        %925 = vmatprep.subr.bf16.mxu0 0
        %926 = vmatpush1.bf16.msra.mxu0 0
        %927 = vmatprep.subr.bf16.mxu0 0
        %928 = vmatpush1.bf16.msra.mxu0 0
        %929 = vmatprep.subr.bf16.mxu0 0
        %930 = vmatpush1.bf16.msra.mxu0 0
        %931 = vmatprep.subr.bf16.mxu0 0
        %932 = vmatpush1.bf16.msra.mxu0 0
        %933 = vmatprep.subr.bf16.mxu0 0
        %934 = vmatpush1.bf16.msra.mxu0 0
        %935 = vmatprep.subr.bf16.mxu0 0
        %936 = vmatpush1.bf16.msra.mxu0 0
        %937 = vmatprep.subr.bf16.mxu0 0
        %938 = vmatpush1.bf16.msra.mxu0 0
        %939 = vmatprep.subr.bf16.mxu0 0
        %940 = vmatpush1.bf16.msra.mxu0 0
        %941 = vmatprep.subr.bf16.mxu0 0
        %942 = vmatpush1.bf16.msra.mxu0 0
        %943 = vmatprep.subr.bf16.mxu0 0
        %944 = vmatpush1.bf16.msra.mxu0 0
        %945 = vmatprep.subr.bf16.mxu0 0
        %946 = vmatpush1.bf16.msra.mxu0 0
        %947 = vmatprep.subr.bf16.mxu0 0
        %948 = vmatpush1.bf16.msra.mxu0 0
        %949 = vmatprep.subr.bf16.mxu0 0
        %950 = vmatpush1.bf16.msra.mxu0 0
        %951 = vmatprep.subr.bf16.mxu0 0
        %952 = vmatpush1.bf16.msra.mxu0 0
        %953 = vmatprep.subr.bf16.mxu0 0
        %954 = vmatpush1.bf16.msra.mxu0 0
        %955 = vmatprep.mubr.bf16.mxu0 0
        %956 = vmatmul.mubr.bf16.gmra.mrb[0].mxu0 %v917
        %v957 = vpop.f32.mrb[0].mxu0
        %v958 = vadd.f32 0.0, %v957
        %v959 = vpop.f32.mrb[0].mxu0
        %v960 = vpop.f32.mrb[0].mxu0
        %v961 = vpop.f32.mrb[0].mxu0
        %962 = vdwg.mxu0
        %v963 = vrcp.pop %v912
        %v964 = vmul.f32 %v958, %v963
        %v965 = vpack.c.bf16 %v964, %v964
        %v966 = vld [vmem:[%s663] sm:$0xf]
        %v968 = vsel %vm857, %v965, 0
        %v971 = vsel %vm919, %v966, 0
        %973 = vmatprep.subr.bf16.mxu0 0
        %974 = vmatpush1.bf16.msra.mxu0 %v971
        %975 = vmatprep.subr.bf16.mxu0 0
        %976 = vmatpush1.bf16.msra.mxu0 0
        %977 = vmatprep.subr.bf16.mxu0 0
        %978 = vmatpush1.bf16.msra.mxu0 0
        %979 = vmatprep.subr.bf16.mxu0 0
        %980 = vmatpush1.bf16.msra.mxu0 0
        %981 = vmatprep.subr.bf16.mxu0 0
        %982 = vmatpush1.bf16.msra.mxu0 0
        %983 = vmatprep.subr.bf16.mxu0 0
        %984 = vmatpush1.bf16.msra.mxu0 0
        %985 = vmatprep.subr.bf16.mxu0 0
        %986 = vmatpush1.bf16.msra.mxu0 0
        %987 = vmatprep.subr.bf16.mxu0 0
        %988 = vmatpush1.bf16.msra.mxu0 0
        %989 = vmatprep.subr.bf16.mxu0 0
        %990 = vmatpush1.bf16.msra.mxu0 0
        %991 = vmatprep.subr.bf16.mxu0 0
        %992 = vmatpush1.bf16.msra.mxu0 0
        %993 = vmatprep.subr.bf16.mxu0 0
        %994 = vmatpush1.bf16.msra.mxu0 0
        %995 = vmatprep.subr.bf16.mxu0 0
        %996 = vmatpush1.bf16.msra.mxu0 0
        %997 = vmatprep.subr.bf16.mxu0 0
        %998 = vmatpush1.bf16.msra.mxu0 0
        %999 = vmatprep.subr.bf16.mxu0 0
        %1000 = vmatpush1.bf16.msra.mxu0 0
        %1001 = vmatprep.subr.bf16.mxu0 0
        %1002 = vmatpush1.bf16.msra.mxu0 0
        %1003 = vmatprep.subr.bf16.mxu0 0
        %1004 = vmatpush1.bf16.msra.mxu0 0
        %1005 = vmatprep.mubr.bf16.mxu0 0
        %1006 = vmatmul.mubr.bf16.gmra.mrb[0].mxu0 %v968
        %v1007 = vpop.f32.mrb[0].mxu0
        %v1008 = vadd.f32 0.0, %v1007
        %v1009 = vpop.f32.mrb[0].mxu0
        %v1010 = vpop.f32.mrb[0].mxu0
        %v1011 = vpop.f32.mrb[0].mxu0
        %1012 = vdwg.mxu0
        loop: start=1, step=1, limit=4
        $region119: #{tpu_custom_call.1} parent=79 // loop_pre_header
          _
        $region120: #{tpu_custom_call.1} parent=79 // loop_header
          %s1014 = sphi 1, %s1018
          %p1015 = scmp.ge.s32.totalorder %s1014, 4
          %v1019 = vphi %v1008, %v1247
        $region121: #{tpu_custom_call.1} parent=79 // loop_header_branch
          %1017 = sbr.rel (%p1015) target = $region125
        $region122: #{tpu_custom_call.1} parent=79 // loop_body
          %s1020 = smul.u32 %s1014, 4
          %s1021 = smul.addr %s1020, 4
          %s1022 = scalar_lea.vmem %s654, %s1021
          %v1023 = vld [vmem:[%s1022] sm:$0xf]
          %v1024 = vld [vmem:[%s1022 + $0x4] sm:$0xf]
          %v1025 = vld [vmem:[%s1022 + $0x8] sm:$0xf]
          %v1026 = vld [vmem:[%s1022 + $0xc] sm:$0xf]
          %s1027 = scalar_lea.vmem %s658, %s1014
          %v1028 = vld [vmem:[%s1027] sm:$0x1]
          %v1030 = vlaneseq
          %v1031 = vshrl.u32 %v1030, 7
          %v1032 = vsub.s32 0, %v1031
          %v1033 = vrot.slane %v1028, %v1032
          %v1039 = vunpack.c.l.b16 %v1023
          %v1040 = vunpack.c.l.b16 %v1024
          %v1041 = vunpack.c.l.b16 %v1025
          %v1042 = vunpack.c.l.b16 %v1026
          %v1043 = vpack.c.b16 %v1040, %v1039
          %v1044 = vpack.c.b16 %v1042, %v1041
          %1047 = vmatprep.subr.bf16.mxu0 0
          %1048 = vmatpush1.bf16.msra.mxu0 %v1043
          %1049 = vmatprep.subr.bf16.mxu0 0
          %1050 = vmatpush1.bf16.msra.mxu0 %v1044
          %1051 = vmatprep.subr.bf16.mxu0 0
          %1052 = vmatpush1.bf16.msra.mxu0 0
          %1053 = vmatprep.subr.bf16.mxu0 0
          %1054 = vmatpush1.bf16.msra.mxu0 0
          %1055 = vmatprep.subr.bf16.mxu0 0
          %1056 = vmatpush1.bf16.msra.mxu0 0
          %1057 = vmatprep.subr.bf16.mxu0 0
          %1058 = vmatpush1.bf16.msra.mxu0 0
          %1059 = vmatprep.subr.bf16.mxu0 0
          %1060 = vmatpush1.bf16.msra.mxu0 0
          %1061 = vmatprep.subr.bf16.mxu0 0
          %1062 = vmatpush1.bf16.msra.mxu0 0
          %1063 = vmatprep.subr.bf16.mxu0 0
          %1064 = vmatpush1.bf16.msra.mxu0 0
          %1065 = vmatprep.subr.bf16.mxu0 0
          %1066 = vmatpush1.bf16.msra.mxu0 0
          %1067 = vmatprep.subr.bf16.mxu0 0
          %1068 = vmatpush1.bf16.msra.mxu0 0
          %1069 = vmatprep.subr.bf16.mxu0 0
          %1070 = vmatpush1.bf16.msra.mxu0 0
          %1071 = vmatprep.subr.bf16.mxu0 0
          %1072 = vmatpush1.bf16.msra.mxu0 0
          %1073 = vmatprep.subr.bf16.mxu0 0
          %1074 = vmatpush1.bf16.msra.mxu0 0
          %1075 = vmatprep.subr.bf16.mxu0 0
          %1076 = vmatpush1.bf16.msra.mxu0 0
          %1077 = vmatprep.subr.bf16.mxu0 0
          %1078 = vmatpush1.bf16.msra.mxu0 0
          %1079 = vmatprep.mubr.bf16.mxu0 0
          %1080 = vmatmul.mubr.bf16.gmra.mrb[0].mxu0 %v805
          %v1081 = vpop.f32.mrb[0].mxu0
          %v1082 = vadd.f32 %v1033, %v1081
          %v1083 = vpop.f32.mrb[0].mxu0
          %v1084 = vpop.f32.mrb[0].mxu0
          %v1085 = vpop.f32.mrb[0].mxu0
          %1086 = vdwg.mxu0
          %v1087 = vpack.c.bf16 %v1082, %v1082
          %1089 = vrot.lane.b32.xlu0 %v1087, 120
          %v1090 = vpop.permute.xlu0 %1089
          %v1092 = vsel %vm857, %v1087, 0
          %v1095 = vsel %vm857, %v1090, 0
          %1097 = vmatprep.subr.bf16.mxu0 0
          %1098 = vmatpush1.bf16.xpose.msra.mxu0 %v1095
          %1099 = vmatprep.subr.bf16.mxu0 0
          %1100 = vmatpush1.bf16.xpose.msra.mxu0 0
          %1101 = vmatprep.subr.bf16.mxu0 0
          %1102 = vmatpush1.bf16.xpose.msra.mxu0 0
          %1103 = vmatprep.subr.bf16.mxu0 0
          %1104 = vmatpush1.bf16.xpose.msra.mxu0 0
          %1105 = vmatprep.subr.bf16.mxu0 0
          %1106 = vmatpush1.bf16.xpose.msra.mxu0 0
          %1107 = vmatprep.subr.bf16.mxu0 0
          %1108 = vmatpush1.bf16.xpose.msra.mxu0 0
          %1109 = vmatprep.subr.bf16.mxu0 0
          %1110 = vmatpush1.bf16.xpose.msra.mxu0 0
          %1111 = vmatprep.subr.bf16.mxu0 0
          %1112 = vmatpush1.bf16.xpose.msra.mxu0 0
          %1113 = vmatprep.subr.bf16.mxu0 0
          %1114 = vmatpush1.bf16.xpose.msra.mxu0 0
          %1115 = vmatprep.subr.bf16.mxu0 0
          %1116 = vmatpush1.bf16.xpose.msra.mxu0 0
          %1117 = vmatprep.subr.bf16.mxu0 0
          %1118 = vmatpush1.bf16.xpose.msra.mxu0 0
          %1119 = vmatprep.subr.bf16.mxu0 0
          %1120 = vmatpush1.bf16.xpose.msra.mxu0 0
          %1121 = vmatprep.subr.bf16.mxu0 0
          %1122 = vmatpush1.bf16.xpose.msra.mxu0 0
          %1123 = vmatprep.subr.bf16.mxu0 0
          %1124 = vmatpush1.bf16.xpose.msra.mxu0 0
          %1125 = vmatprep.subr.bf16.mxu0 0
          %1126 = vmatpush1.bf16.xpose.msra.mxu0 0
          %1127 = vmatprep.subr.bf16.mxu0 0
          %1128 = vmatpush1.bf16.xpose.msra.mxu0 0
          %1129 = vmatprep.mubr.bf16.mxu0 0
          %1130 = vmatmul.mubr.bf16.gmra.mrb[0].mxu0 %v1092
          %v1131 = vpop.f32.mrb[0].mxu0
          %v1132 = vadd.f32 %v852, %v1131
          %v1133 = vpop.f32.mrb[0].mxu0
          %v1134 = vpop.f32.mrb[0].mxu0
          %v1135 = vpop.f32.mrb[0].mxu0
          %1136 = vdwg.mxu0
          %v1137 = vsel %vm857, %v1132, -inf
          %1138 = vmax.xlane.f32.xlu0 %v1137
          %v1139 = vpop.xlane.xlu0 %1138
          %v1140 = vsub.f32 %v1132, %v1139
          %v1141 = vmul.f32 %v1140, 1.442695
          %v1142 = vpow.pop %v1141
          %v1143 = vsel %vm857, %v1142, 0.0
          %1144 = vadd.xlane.f32.xlu0 %v1143
          %v1145 = vpop.xlane.xlu0 %1144
          %v1146 = vpack.c.bf16 %v1142, %v1142
          %1147 = vrot.lane.b32.xlu0 %v1087, 112
          %v1148 = vpop.permute.xlu0 %1147
          %v1150 = vsel %vm857, %v1146, 0
          %v1153 = vsel %vm919, %v1148, 0
          %1155 = vmatprep.subr.bf16.mxu0 0
          %1156 = vmatpush1.bf16.msra.mxu0 %v1153
          %1157 = vmatprep.subr.bf16.mxu0 0
          %1158 = vmatpush1.bf16.msra.mxu0 0
          %1159 = vmatprep.subr.bf16.mxu0 0
          %1160 = vmatpush1.bf16.msra.mxu0 0
          %1161 = vmatprep.subr.bf16.mxu0 0
          %1162 = vmatpush1.bf16.msra.mxu0 0
          %1163 = vmatprep.subr.bf16.mxu0 0
          %1164 = vmatpush1.bf16.msra.mxu0 0
          %1165 = vmatprep.subr.bf16.mxu0 0
          %1166 = vmatpush1.bf16.msra.mxu0 0
          %1167 = vmatprep.subr.bf16.mxu0 0
          %1168 = vmatpush1.bf16.msra.mxu0 0
          %1169 = vmatprep.subr.bf16.mxu0 0
          %1170 = vmatpush1.bf16.msra.mxu0 0
          %1171 = vmatprep.subr.bf16.mxu0 0
          %1172 = vmatpush1.bf16.msra.mxu0 0
          %1173 = vmatprep.subr.bf16.mxu0 0
          %1174 = vmatpush1.bf16.msra.mxu0 0
          %1175 = vmatprep.subr.bf16.mxu0 0
          %1176 = vmatpush1.bf16.msra.mxu0 0
          %1177 = vmatprep.subr.bf16.mxu0 0
          %1178 = vmatpush1.bf16.msra.mxu0 0
          %1179 = vmatprep.subr.bf16.mxu0 0
          %1180 = vmatpush1.bf16.msra.mxu0 0
          %1181 = vmatprep.subr.bf16.mxu0 0
          %1182 = vmatpush1.bf16.msra.mxu0 0
          %1183 = vmatprep.subr.bf16.mxu0 0
          %1184 = vmatpush1.bf16.msra.mxu0 0
          %1185 = vmatprep.subr.bf16.mxu0 0
          %1186 = vmatpush1.bf16.msra.mxu0 0
          %1187 = vmatprep.mubr.bf16.mxu0 0
          %1188 = vmatmul.mubr.bf16.gmra.mrb[0].mxu0 %v1150
          %v1189 = vpop.f32.mrb[0].mxu0
          %v1190 = vadd.f32 0.0, %v1189
          %v1191 = vpop.f32.mrb[0].mxu0
          %v1192 = vpop.f32.mrb[0].mxu0
          %v1193 = vpop.f32.mrb[0].mxu0
          %1194 = vdwg.mxu0
          %v1195 = vrcp.pop %v1145
          %v1196 = vmul.f32 %v1190, %v1195
          %v1197 = vpack.c.bf16 %v1196, %v1196
          %s1198 = smul.addr %s1014, 4
          %s1199 = scalar_lea.vmem %s663, %s1198
          %v1200 = vld [vmem:[%s1199] sm:$0xf]
          %v1202 = vsel %vm857, %v1197, 0
          %v1205 = vsel %vm919, %v1200, 0
          %1207 = vmatprep.subr.bf16.mxu0 0
          %1208 = vmatpush1.bf16.msra.mxu0 %v1205
          %1209 = vmatprep.subr.bf16.mxu0 0
          %1210 = vmatpush1.bf16.msra.mxu0 0
          %1211 = vmatprep.subr.bf16.mxu0 0
          %1212 = vmatpush1.bf16.msra.mxu0 0
          %1213 = vmatprep.subr.bf16.mxu0 0
          %1214 = vmatpush1.bf16.msra.mxu0 0
          %1215 = vmatprep.subr.bf16.mxu0 0
          %1216 = vmatpush1.bf16.msra.mxu0 0
          %1217 = vmatprep.subr.bf16.mxu0 0
          %1218 = vmatpush1.bf16.msra.mxu0 0
          %1219 = vmatprep.subr.bf16.mxu0 0
          %1220 = vmatpush1.bf16.msra.mxu0 0
          %1221 = vmatprep.subr.bf16.mxu0 0
          %1222 = vmatpush1.bf16.msra.mxu0 0
          %1223 = vmatprep.subr.bf16.mxu0 0
          %1224 = vmatpush1.bf16.msra.mxu0 0
          %1225 = vmatprep.subr.bf16.mxu0 0
          %1226 = vmatpush1.bf16.msra.mxu0 0
          %1227 = vmatprep.subr.bf16.mxu0 0
          %1228 = vmatpush1.bf16.msra.mxu0 0
          %1229 = vmatprep.subr.bf16.mxu0 0
          %1230 = vmatpush1.bf16.msra.mxu0 0
          %1231 = vmatprep.subr.bf16.mxu0 0
          %1232 = vmatpush1.bf16.msra.mxu0 0
          %1233 = vmatprep.subr.bf16.mxu0 0
          %1234 = vmatpush1.bf16.msra.mxu0 0
          %1235 = vmatprep.subr.bf16.mxu0 0
          %1236 = vmatpush1.bf16.msra.mxu0 0
          %1237 = vmatprep.subr.bf16.mxu0 0
          %1238 = vmatpush1.bf16.msra.mxu0 0
          %1239 = vmatprep.mubr.bf16.mxu0 0
          %1240 = vmatmul.mubr.bf16.gmra.mrb[0].mxu0 %v1202
          %v1241 = vpop.f32.mrb[0].mxu0
          %v1242 = vadd.f32 0.0, %v1241
          %v1243 = vpop.f32.mrb[0].mxu0
          %v1244 = vpop.f32.mrb[0].mxu0
          %v1245 = vpop.f32.mrb[0].mxu0
          %1246 = vdwg.mxu0
          %v1247 = vadd.f32 %v1019, %v1242
        $region123: #{tpu_custom_call.1} parent=79 // loop_footer
          %s1018 = sadd.s32 1, %s1014
        $region124: #{tpu_custom_call.1} parent=79 // loop_footer_branch
          %1013 = sbr.rel target = $region120
        $region125: #{tpu_custom_call.1} parent=79 // loop_exit
          _
        %v1248 = vadd.f32 %v747, %v1019
        %v1249 = vld [vmem:[%s666] sm:$0x1]
        %v1251 = vlaneseq
        %v1252 = vshrl.u32 %v1251, 7
        %v1253 = vsub.s32 0, %v1252
        %v1254 = vrot.slane %v1249, %v1253
        %v1256 = vadd.f32 %v1248, %v1254
        %1257 = vst.msk [vmem:[#allocation2] sm:$0xff] %vm751, %v1256
        %v1258 = vld [vmem:[%s691] sm:$0x1]
        %v1259 = vld [vmem:[%s694] sm:$0x1]
        %v1260 = vld [vmem:[%s680] sm:$0x1]
        %v1261 = vld [vmem:[%s688] sm:$0x1]
        %v1262 = vld [vmem:[#allocation2] sm:$0xff]
        %v1263 = vsel %vm751, %v1262, 0.0
        %1264 = vadd.xlane.f32.xlu0 %v1263
        %v1265 = vpop.xlane.xlu0 %1264
        %v1266 = vmul.f32 %v1265, %v755
        %v1267 = vsub.f32 %v1262, %v1266
        %v1268 = vmul.f32 %v1267, %v1267
        %v1269 = vsel %vm751, %v1268, 0.0
        %1270 = vadd.xlane.f32.xlu0 %v1269
        %v1271 = vpop.xlane.xlu0 %1270
        %v1272 = vmul.f32 %v1271, %v755
        %v1273 = vadd.f32 %v1272, 1e-05
        %v1274 = vrsqrt.pop %v1273
        %v1275 = vmul.f32 %v1267, %v1274
        %v1277 = vlaneseq
        %v1278 = vshrl.u32 %v1277, 7
        %v1279 = vsub.s32 0, %v1278
        %v1280 = vrot.slane %v1258, %v1279
        %v1282 = vmul.f32 %v1275, %v1280
        %v1284 = vlaneseq
        %v1285 = vshrl.u32 %v1284, 7
        %v1286 = vsub.s32 0, %v1285
        %v1287 = vrot.slane %v1259, %v1286
        %v1289 = vadd.f32 %v1282, %v1287
        %v1290 = vpack.c.bf16 %v1289, %v1289
        %v1291 = vld [vmem:[%s677] sm:$0xf]
        %v1292 = vld [vmem:[%s677 + $0x4] sm:$0xf]
        %v1293 = vld [vmem:[%s677 + $0x8] sm:$0xf]
        %v1294 = vld [vmem:[%s677 + $0xc] sm:$0xf]
        %v1296 = vlaneseq
        %v1297 = vshrl.u32 %v1296, 7
        %v1298 = vsub.s32 0, %v1297
        %v1299 = vrot.slane %v1260, %v1298
        %v1305 = vunpack.c.l.b16 %v1291
        %v1306 = vunpack.c.l.b16 %v1292
        %v1307 = vunpack.c.l.b16 %v1293
        %v1308 = vunpack.c.l.b16 %v1294
        %v1309 = vpack.c.b16 %v1306, %v1305
        %v1310 = vpack.c.b16 %v1308, %v1307
        %v1314 = vsel %vm751, %v1290, 0
        %1316 = vmatprep.subr.bf16.mxu0 0
        %1317 = vmatpush1.bf16.msra.mxu0 %v1309
        %1318 = vmatprep.subr.bf16.mxu0 0
        %1319 = vmatpush1.bf16.msra.mxu0 %v1310
        %1320 = vmatprep.subr.bf16.mxu0 0
        %1321 = vmatpush1.bf16.msra.mxu0 0
        %1322 = vmatprep.subr.bf16.mxu0 0
        %1323 = vmatpush1.bf16.msra.mxu0 0
        %1324 = vmatprep.subr.bf16.mxu0 0
        %1325 = vmatpush1.bf16.msra.mxu0 0
        %1326 = vmatprep.subr.bf16.mxu0 0
        %1327 = vmatpush1.bf16.msra.mxu0 0
        %1328 = vmatprep.subr.bf16.mxu0 0
        %1329 = vmatpush1.bf16.msra.mxu0 0
        %1330 = vmatprep.subr.bf16.mxu0 0
        %1331 = vmatpush1.bf16.msra.mxu0 0
        %1332 = vmatprep.subr.bf16.mxu0 0
        %1333 = vmatpush1.bf16.msra.mxu0 0
        %1334 = vmatprep.subr.bf16.mxu0 0
        %1335 = vmatpush1.bf16.msra.mxu0 0
        %1336 = vmatprep.subr.bf16.mxu0 0
        %1337 = vmatpush1.bf16.msra.mxu0 0
        %1338 = vmatprep.subr.bf16.mxu0 0
        %1339 = vmatpush1.bf16.msra.mxu0 0
        %1340 = vmatprep.subr.bf16.mxu0 0
        %1341 = vmatpush1.bf16.msra.mxu0 0
        %1342 = vmatprep.subr.bf16.mxu0 0
        %1343 = vmatpush1.bf16.msra.mxu0 0
        %1344 = vmatprep.subr.bf16.mxu0 0
        %1345 = vmatpush1.bf16.msra.mxu0 0
        %1346 = vmatprep.subr.bf16.mxu0 0
        %1347 = vmatpush1.bf16.msra.mxu0 0
        %1348 = vmatprep.mubr.bf16.mxu0 0
        %1349 = vmatmul.mubr.bf16.gmra.mrb[0].mxu0 %v1314
        %v1350 = vpop.f32.mrb[0].mxu0
        %v1351 = vadd.f32 %v1299, %v1350
        %v1352 = vpop.f32.mrb[0].mxu0
        %v1353 = vpop.f32.mrb[0].mxu0
        %v1354 = vpop.f32.mrb[0].mxu0
        %1355 = vdwg.mxu0
        %v1356 = vmax.f32 %v1351, 0.0
        %v1357 = vpack.c.bf16 %v1356, %v1356
        %v1358 = vld [vmem:[%s685] sm:$0xf]
        %v1359 = vld [vmem:[%s685 + $0x4] sm:$0xf]
        %v1360 = vld [vmem:[%s685 + $0x8] sm:$0xf]
        %v1361 = vld [vmem:[%s685 + $0xc] sm:$0xf]
        %v1362 = vld [vmem:[%s685 + $0x10] sm:$0xf]
        %v1363 = vld [vmem:[%s685 + $0x14] sm:$0xf]
        %v1364 = vld [vmem:[%s685 + $0x18] sm:$0xf]
        %v1365 = vld [vmem:[%s685 + $0x1c] sm:$0xf]
        %v1367 = vlaneseq
        %v1368 = vshrl.u32 %v1367, 7
        %v1369 = vsub.s32 0, %v1368
        %v1370 = vrot.slane %v1261, %v1369
        %v1380 = vunpack.c.l.b16 %v1358
        %v1381 = vunpack.c.l.b16 %v1359
        %v1382 = vunpack.c.l.b16 %v1360
        %v1383 = vunpack.c.l.b16 %v1361
        %v1384 = vunpack.c.l.b16 %v1362
        %v1385 = vunpack.c.l.b16 %v1363
        %v1386 = vunpack.c.l.b16 %v1364
        %v1387 = vunpack.c.l.b16 %v1365
        %v1388 = vpack.c.b16 %v1381, %v1380
        %v1389 = vpack.c.b16 %v1383, %v1382
        %v1390 = vpack.c.b16 %v1385, %v1384
        %v1391 = vpack.c.b16 %v1387, %v1386
        %vm1396 = vcmask 523264
        %v1398 = vsel %vm1396, %v1357, 0
        %1400 = vmatprep.subr.bf16.mxu0 0
        %1401 = vmatpush1.bf16.msra.mxu0 %v1388
        %1402 = vmatprep.subr.bf16.mxu0 0
        %1403 = vmatpush1.bf16.msra.mxu0 %v1389
        %1404 = vmatprep.subr.bf16.mxu0 0
        %1405 = vmatpush1.bf16.msra.mxu0 %v1390
        %1406 = vmatprep.subr.bf16.mxu0 0
        %1407 = vmatpush1.bf16.msra.mxu0 %v1391
        %1408 = vmatprep.subr.bf16.mxu0 0
        %1409 = vmatpush1.bf16.msra.mxu0 0
        %1410 = vmatprep.subr.bf16.mxu0 0
        %1411 = vmatpush1.bf16.msra.mxu0 0
        %1412 = vmatprep.subr.bf16.mxu0 0
        %1413 = vmatpush1.bf16.msra.mxu0 0
        %1414 = vmatprep.subr.bf16.mxu0 0
        %1415 = vmatpush1.bf16.msra.mxu0 0
        %1416 = vmatprep.subr.bf16.mxu0 0
        %1417 = vmatpush1.bf16.msra.mxu0 0
        %1418 = vmatprep.subr.bf16.mxu0 0
        %1419 = vmatpush1.bf16.msra.mxu0 0
        %1420 = vmatprep.subr.bf16.mxu0 0
        %1421 = vmatpush1.bf16.msra.mxu0 0
        %1422 = vmatprep.subr.bf16.mxu0 0
        %1423 = vmatpush1.bf16.msra.mxu0 0
        %1424 = vmatprep.subr.bf16.mxu0 0
        %1425 = vmatpush1.bf16.msra.mxu0 0
        %1426 = vmatprep.subr.bf16.mxu0 0
        %1427 = vmatpush1.bf16.msra.mxu0 0
        %1428 = vmatprep.subr.bf16.mxu0 0
        %1429 = vmatpush1.bf16.msra.mxu0 0
        %1430 = vmatprep.subr.bf16.mxu0 0
        %1431 = vmatpush1.bf16.msra.mxu0 0
        %1432 = vmatprep.mubr.bf16.mxu0 0
        %1433 = vmatmul.mubr.bf16.gmra.mrb[0].mxu0 %v1398
        %v1434 = vpop.f32.mrb[0].mxu0
        %v1435 = vadd.f32 %v1370, %v1434
        %v1436 = vpop.f32.mrb[0].mxu0
        %v1437 = vpop.f32.mrb[0].mxu0
        %v1438 = vpop.f32.mrb[0].mxu0
        %1439 = vdwg.mxu0
        %v1440 = vadd.f32 %v1262, %v1435
        %1441 = vst.msk [vmem:[#allocation2] sm:$0xff] %vm751, %v1440
        %p1442 = scmp.eq.s32.totalorder %s35, 1
        // Predicated region
        $region126: #{tpu_custom_call.1} parent=79 // pred_check
          %p1443 = pneg %p1442
        $region127: #{tpu_custom_call.1} parent=79 // pred_check_branch
          %1445 = sbr.rel (%p1443) target = $region129
        $region128: #{tpu_custom_call.1} parent=79 // pred_region
          %v1446 = vld [vmem:[#allocation2] sm:$0xff]
          %v1447 = vld [vmem:[%s14] sm:$0x1]
          %v1448 = vld [vmem:[%s15] sm:$0x1]
          %v1449 = vsel %vm751, %v1446, 0.0
          %1450 = vadd.xlane.f32.xlu0 %v1449
          %v1451 = vpop.xlane.xlu0 %1450
          %v1452 = vmul.f32 %v1451, %v755
          %v1453 = vsub.f32 %v1446, %v1452
          %v1454 = vmul.f32 %v1453, %v1453
          %v1455 = vsel %vm751, %v1454, 0.0
          %1456 = vadd.xlane.f32.xlu0 %v1455
          %v1457 = vpop.xlane.xlu0 %1456
          %v1458 = vmul.f32 %v1457, %v755
          %v1459 = vadd.f32 %v1458, 1e-05
          %v1460 = vrsqrt.pop %v1459
          %v1461 = vmul.f32 %v1453, %v1460
          %v1463 = vlaneseq
          %v1464 = vshrl.u32 %v1463, 7
          %v1465 = vsub.s32 0, %v1464
          %v1466 = vrot.slane %v1447, %v1465
          %v1468 = vmul.f32 %v1461, %v1466
          %v1470 = vlaneseq
          %v1471 = vshrl.u32 %v1470, 7
          %v1472 = vsub.s32 0, %v1471
          %v1473 = vrot.slane %v1448, %v1472
          %v1475 = vadd.f32 %v1468, %v1473
          %1476 = vst.msk [vmem:[%s646] sm:$0xff] %vm751, %v1475
        $region129: #{tpu_custom_call.1} parent=79 // pred_fallthru
          _
        %s1477 = sand.u32 %s430, 1
        %s1478 = scalar_lea.sflag [#allocation5], %s1477
        %s1479 = sand.u32 %s430, 1
        %s1480 = smul.addr %s1479, 8
        %s1481 = scalar_lea.vmem [#allocation4], %s1480
        // Predicated region
        $region130: #{tpu_custom_call.1} parent=79 // pred_check
          %p1482 = pneg %p440
        $region131: #{tpu_custom_call.1} parent=79 // pred_check_branch
          %1484 = sbr.rel (%p1482) target = $region133
        $region132: #{tpu_custom_call.1} parent=79 // pred_region
          %s1486 = ssub.s32 128, 128
          %1487 = vsyncadd %s1478, %s1486
          %s1488 = smul.addr %s34, 128
          %s1489 = scalar_lea.hbm %s16, %s1488
          %s1491 = sshll.u32 %s1481, 4
          %s1492 = int_to_ptr.vmem [resolvable:$true] %s1491
          %1494 = dma.vmem_to_hbm [thread:$0]  %s1492, 128, %s1489, %s1478
        $region133: #{tpu_custom_call.1} parent=79 // pred_fallthru
          _
      $region80: #{tpu_custom_call.1} parent=5 // pred_fallthru
        _
      %p1495 = scmp.le.s32.totalorder 2, %s25
      // Predicated region
      $region134: #{tpu_custom_call.1} parent=5 // pred_check
        %p1496 = pneg %p1495
      $region135: #{tpu_custom_call.1} parent=5 // pred_check_branch
        %1498 = sbr.rel (%p1496) target = $region137
      $region136: #{tpu_custom_call.1} parent=5 // pred_region
        %s1499 = ssub.s32 %s25, 2
        // Predicated region
        $region138: #{tpu_custom_call.1} parent=136 // pred_check
          %p1500 = pneg %p446
        $region139: #{tpu_custom_call.1} parent=136 // pred_check_branch
          %1502 = sbr.rel (%p1500) target = $region141
        $region140: #{tpu_custom_call.1} parent=136 // pred_region
          %s1503 = sand.u32 %s431, 1
          %s1504 = scalar_lea.sflag [#allocation5], %s1503
          %s1505 = sand.u32 %s431, 1
          %s1506 = smul.addr %s1505, 8
          %s1507 = scalar_lea.vmem [#allocation4], %s1506
          %1508 = dma.done %s1504, 128
        $region141: #{tpu_custom_call.1} parent=136 // pred_fallthru
          _
      $region137: #{tpu_custom_call.1} parent=5 // pred_fallthru
        _
    $region6: #{tpu_custom_call.1} parent=1 // loop_footer
      %s29 = sadd.s32 1, %s25
    $region7: #{tpu_custom_call.1} parent=1 // loop_footer_branch
      %24 = sbr.rel target = $region3
    $region8: #{tpu_custom_call.1} parent=1 // loop_exit
      _
    %1509 = vsyncpa [#allocation5], 1
    %s1510 = scalar_lea.sflag [#allocation5], 1
    %1511 = vsyncpa %s1510, 1
  %1512 = vsyncmov [#allocation3]
  %s1513 = vpop.sfrf %1512
  %p1514 = scmp.eq.s32.totalorder %s1513, 0
  %p1515 = pneg %p1514
  %1517 = shalt.err (%p1515)

</llo_original>
